<compile_context>
chip_gen: v5e
topology: v5e:2x2
jax: 0.10.0
libtpu: 0.0.40
codegen_flags: <defaults>
</compile_context>

<pallas_src>
import functools

import jax
import jax.numpy as jnp
from jax.experimental import pallas as pl
from jax.experimental.pallas import tpu as pltpu


# ---------------------------------------------------------------------------
# Pallas kernels
# ---------------------------------------------------------------------------
def input_proj_kernel(x_ref, w_ref, b_ref, o_ref):
    """Hoisted input projection: (bm, Din) @ (Din, 3H) + (1, 3H) -> (bm, 3H)."""
    o_ref[...] = (jnp.dot(x_ref[...], w_ref[...],
                          preferred_element_type=jnp.float32)
                  + b_ref[...]).astype(o_ref.dtype)


def _gru_chunk_recurrence(gi_ref, whh_ref, bhn_ref, y_ref, h_scratch, *, unroll):
    """Run TS GRU steps for one (batch-block, time-chunk) grid cell.

    gi_ref    : (TS, TB, 3H)  precomputed x@W_ih + b_ih + [b_hr|b_hz|0], gates [r|z|n]
    whh_ref   : (H, 3H)       packed hidden weights (gates [r|z|n])
    bhn_ref   : (1, H)        b_hn (must stay inside the r* gating)
    y_ref     : (TS, TB, H) or None   per-step layer outputs (next layer's input)
    h_scratch : (TB, H) f32   carried hidden state (resident across time chunks)
    Returns the hidden state after the last step of the chunk.
    """
    c = pl.program_id(1)

    @pl.when(c == 0)
    def _():
        h_scratch[...] = jnp.zeros_like(h_scratch)

    TS = gi_ref.shape[0]
    H = h_scratch.shape[-1]
    whh = whh_ref[...]       # (H, 3H) - loaded once per chunk
    b_hn = bhn_ref[...]      # (1, H)

    def step(t, h):
        # One fused matmul for all three hidden gates.
        gh = jnp.dot(h, whh, preferred_element_type=jnp.float32)   # (TB, 3H)
        gi_t = gi_ref[t]                                           # (TB, 3H)
        r = jax.nn.sigmoid(gi_t[:, :H] + gh[:, :H])
        z = jax.nn.sigmoid(gi_t[:, H:2 * H] + gh[:, H:2 * H])
        n = jnp.tanh(gi_t[:, 2 * H:] + r * (gh[:, 2 * H:] + b_hn))
        h_new = n + z * (h - n)                                    # == (1-z)*n + z*h
        if y_ref is not None:
            y_ref[t] = h_new.astype(y_ref.dtype)
        return h_new

    h_last = jax.lax.fori_loop(0, TS, step, h_scratch[...], unroll=unroll)
    h_scratch[...] = h_last
    return h_last


def gru_chunk_kernel(gi_ref, whh_ref, bhn_ref, y_ref, h_scratch, *, unroll):
    """Intermediate GRU layer: emits the full output sequence."""
    _gru_chunk_recurrence(gi_ref, whh_ref, bhn_ref, y_ref, h_scratch,
                          unroll=unroll)


def gru_chunk_fc_kernel(gi_ref, whh_ref, bhn_ref, wfc_ref, bfc_ref,
                        hout_ref, h_scratch, *, unroll):
    """Last GRU layer with fc_compress fused: emits only (B, T) at the end."""
    h_last = _gru_chunk_recurrence(gi_ref, whh_ref, bhn_ref, None, h_scratch,
                                   unroll=unroll)

    @pl.when(pl.program_id(1) == pl.num_programs(1) - 1)
    def _():
        hout_ref[...] = (jnp.dot(h_last, wfc_ref[...],
                                 preferred_element_type=jnp.float32)
                         + bfc_ref[...]).astype(hout_ref.dtype)


# ---------------------------------------------------------------------------
# Wrappers
# ---------------------------------------------------------------------------
def _time_chunk(seq_len, max_chunk=128):
    """Largest divisor of seq_len that is <= max_chunk."""
    if seq_len <= max_chunk:
        return seq_len
    best = 1
    for d in range(2, max_chunk + 1):
        if seq_len % d == 0:
            best = d
    return best


def input_proj_pallas(x2d, w, b, block_m=256):
    """One big GEMM for the input projection of a whole layer: (M,Din)@(Din,3H)+b."""
    M, Din = x2d.shape
    N = w.shape[-1]
    bm = M if M <= block_m else block_m
    return pl.pallas_call(
        input_proj_kernel,
        out_shape=jax.ShapeDtypeStruct((M, N), x2d.dtype),
        grid_spec=pltpu.PrefetchScalarGridSpec(
            num_scalar_prefetch=0,
            grid=(pl.cdiv(M, bm),),
            in_specs=[
                pl.BlockSpec((bm, Din), lambda i: (i, 0)),
                pl.BlockSpec((Din, N), lambda i: (0, 0)),
                pl.BlockSpec((1, N), lambda i: (0, 0)),
            ],
            out_specs=pl.BlockSpec((bm, N), lambda i: (i, 0)),
        ),
        compiler_params=pltpu.CompilerParams(
            dimension_semantics=("parallel",)),
    )(x2d, w, b)


def gru_layer_pallas(x_sbd, wih_p, whh_p, b_gi, b_hn, w_fc=None, b_fc=None,
                     *, batch_block=None):
    """One GRU layer (time-chunked recurrence).

    If (w_fc, b_fc) are given this is the LAST layer: the fc_compress Linear is
    fused into the final chunk and the (B, T) result is returned.  Otherwise
    the (S, B, H) output sequence is returned for the next layer.
    """
    S, B, _ = x_sbd.shape
    H = whh_p.shape[0]

    # 1) Hoisted input projection for all S*B rows at once (one MXU GEMM).
    gi = input_proj_pallas(x_sbd.reshape(S * B, -1), wih_p, b_gi)
    gi = gi.reshape(S, B, 3 * H)

    # 2) Sequential recurrence over time chunks (batch blocks are parallel).
    TS = _time_chunk(S)
    nc = S // TS
    TB = B if batch_block is None else batch_block
    nb = B // TB
    unroll = TS <= 16

    in_specs = [
        pl.BlockSpec((TS, TB, 3 * H), lambda b, c: (c, b, 0)),
        pl.BlockSpec((H, 3 * H), lambda b, c: (0, 0)),
        pl.BlockSpec((1, H), lambda b, c: (0, 0)),
    ]
    scratch = [pltpu.VMEM((TB, H), jnp.float32)]
    cparams = pltpu.CompilerParams(
        dimension_semantics=("parallel", "arbitrary"))

    if w_fc is None:
        return pl.pallas_call(
            functools.partial(gru_chunk_kernel, unroll=unroll),
            out_shape=jax.ShapeDtypeStruct((S, B, H), x_sbd.dtype),
            grid_spec=pltpu.PrefetchScalarGridSpec(
                num_scalar_prefetch=0,
                grid=(nb, nc),
                in_specs=in_specs,
                out_specs=pl.BlockSpec((TS, TB, H), lambda b, c: (c, b, 0)),
                scratch_shapes=scratch),
            compiler_params=cparams,
        )(gi, whh_p, b_hn)

    T = w_fc.shape[-1]
    in_specs = in_specs + [
        pl.BlockSpec((H, T), lambda b, c: (0, 0)),
        pl.BlockSpec((1, T), lambda b, c: (0, 0)),
    ]
    return pl.pallas_call(
        functools.partial(gru_chunk_fc_kernel, unroll=unroll),
        out_shape=jax.ShapeDtypeStruct((B, T), x_sbd.dtype),
        grid_spec=pltpu.PrefetchScalarGridSpec(
            num_scalar_prefetch=0,
            grid=(nb, nc),
            in_specs=in_specs,
            out_specs=pl.BlockSpec((TB, T), lambda b, c: (b, 0)),
            scratch_shapes=scratch),
        compiler_params=cparams,
    )(gi, whh_p, b_hn, w_fc, b_fc)


@jax.jit
def temporal_encoder_forward(x_bsd, packed_gru_params, w_fc, b_fc):
    """x_bsd: (batch, seq_len, input_dim) -> H: (batch, temporal_dimension)."""
    h_in = jnp.swapaxes(x_bsd, 0, 1)          # (seq, batch, feat)
    n_layers = len(packed_gru_params)
    out = None
    for i, (wih_p, whh_p, b_gi, b_hn) in enumerate(packed_gru_params):
        if i + 1 < n_layers:
            # TODO(synk): training-mode inter-layer dropout (p=0.1) not applied.
            h_in = gru_layer_pallas(h_in, wih_p, whh_p, b_gi, b_hn)
        else:
            out = gru_layer_pallas(h_in, wih_p, whh_p, b_gi, b_hn, w_fc, b_fc)
    return out


# ---------------------------------------------------------------------------
# Parameter packing (gates r,z,n packed along the last dim; biases folded)
# ---------------------------------------------------------------------------
def pack_gru_params(gru_params):
    packed = []
    for (wih, whh, bih, bhh) in gru_params:
        wih_p = jnp.concatenate([wih[0], wih[1], wih[2]], axis=-1)   # (Din, 3H)
        whh_p = jnp.concatenate([whh[0], whh[1], whh[2]], axis=-1)   # (H, 3H)
        # b_ih for all gates; b_hh folded in for r,z (n's b_hh must stay inside r*(.)).
        b_gi = jnp.concatenate([bih[0] + bhh[0], bih[1] + bhh[1], bih[2]],
                               axis=-1)                              # (1, 3H)
        b_hn = bhh[2]                                                # (1, H)
        packed.append((wih_p, whh_p, b_gi, b_hn))
    return packed


# ---------------------------------------------------------------------------
# Pure-JAX reference (for correctness check)
# ---------------------------------------------------------------------------
def temporal_encoder_ref(x_bsd, gru_params, w_fc, b_fc):
    h_in = x_bsd
    hN = None
    for (wih, whh, bih, bhh) in gru_params:
        B, S, _ = h_in.shape
        H = whh.shape[-1]

        def step(h, x_t):
            gi = jnp.einsum('bd,gdh->gbh', x_t, wih) + bih
            gh = jnp.einsum('bh,ghk->gbk', h, whh) + bhh
            r = jax.nn.sigmoid(gi[0] + gh[0])
            z = jax.nn.sigmoid(gi[1] + gh[1])
            n = jnp.tanh(gi[2] + r * gh[2])
            h_new = (1.0 - z) * n + z * h
            return h_new, h_new

        h0 = jnp.zeros((B, H), jnp.float32)
        hN, ys = jax.lax.scan(step, h0, jnp.swapaxes(h_in, 0, 1))
        h_in = jnp.swapaxes(ys, 0, 1)
    return hN @ w_fc + b_fc


# ---------------------------------------------------------------------------
# Parameter init (deterministic, PyTorch-style uniform(-1/sqrt(H), 1/sqrt(H)))
# ---------------------------------------------------------------------------
def init_params(key, input_dim, hidden_dim, num_layers, temporal_dimension):
    bound = 1.0 / jnp.sqrt(hidden_dim)
    params = []
    for layer in range(num_layers):
        d_in = input_dim if layer == 0 else hidden_dim
        key, k1, k2, k3, k4 = jax.random.split(key, 5)
        wih = jax.random.uniform(k1, (3, d_in, hidden_dim), jnp.float32, -bound, bound)
        whh = jax.random.uniform(k2, (3, hidden_dim, hidden_dim), jnp.float32, -bound, bound)
        bih = jax.random.uniform(k3, (3, 1, hidden_dim), jnp.float32, -bound, bound)
        bhh = jax.random.uniform(k4, (3, 1, hidden_dim), jnp.float32, -bound, bound)
        params.append((wih, whh, bih, bhh))
    key, k5, k6 = jax.random.split(key, 3)
    fc_bound = 1.0 / jnp.sqrt(hidden_dim)
    w_fc = jax.random.uniform(k5, (hidden_dim, temporal_dimension), jnp.float32,
                              -fc_bound, fc_bound)
    b_fc = jax.random.uniform(k6, (1, temporal_dimension), jnp.float32,
                              -fc_bound, fc_bound)
    return params, w_fc, b_fc


# ---------------------------------------------------------------------------
if __name__ == "__main__":
    batch = 2
    seq_len = 8
    input_dim = 16
    hidden_dim = 32
    num_layers = 2
    temporal_dimension = 8

    key = jax.random.PRNGKey(0)
    key, kx = jax.random.split(key)
    x = jax.random.normal(kx, (batch, seq_len, input_dim), jnp.float32)

    gru_params, w_fc, b_fc = init_params(
        key, input_dim, hidden_dim, num_layers, temporal_dimension)
    packed_params = pack_gru_params(gru_params)

    out = temporal_encoder_forward(x, packed_params, w_fc, b_fc)
    out = jax.block_until_ready(out)

    ref = temporal_encoder_ref(x, gru_params, w_fc, b_fc)
    assert out.shape == (batch, temporal_dimension), out.shape
    assert jnp.allclose(out, ref, atol=1e-4, rtol=1e-4), (out, ref)

    print("KERNEL_OK")
</pallas_src>

<mosaic_0001>
module attributes {stable_mosaic.version = 11 : i64} {
  func.func @input_proj_kernel(%arg0: i32, %arg1: memref<16x32xf32, #tpu.memory_space<vmem>>, %arg2: memref<32x96xf32, #tpu.memory_space<vmem>>, %arg3: memref<1x96xf32, #tpu.memory_space<vmem>>, %arg4: memref<16x96xf32, #tpu.memory_space<vmem>>) attributes {dimension_semantics = [#tpu.dimension_semantics<parallel>], iteration_bounds = array<i64: 1>, scalar_prefetch = 0 : i64, scratch_operands = 0 : i64, tpu.core_type = #tpu.core_type<tc>, window_params = [{transform_indices = @transform_0, window_bounds = array<i64: 16, 32>}, {pipeline_mode = #tpu.pipeline_mode<synchronous>, transform_indices = @transform_1, window_bounds = array<i64: 32, 96>}, {pipeline_mode = #tpu.pipeline_mode<synchronous>, transform_indices = @transform_2, window_bounds = array<i64: 1, 96>}, {transform_indices = @transform_3, window_bounds = array<i64: 16, 96>}]} {
    %c0 = arith.constant 0 : index
    %c0_0 = arith.constant 0 : index
    %0 = vector.load %arg1[%c0, %c0_0] : memref<16x32xf32, #tpu.memory_space<vmem>>, vector<16x32xf32>
    %c0_1 = arith.constant 0 : index
    %c0_2 = arith.constant 0 : index
    %1 = vector.load %arg2[%c0_1, %c0_2] : memref<32x96xf32, #tpu.memory_space<vmem>>, vector<32x96xf32>
    %cst = arith.constant dense<0.000000e+00> : vector<16x96xf32>
    %2 = tpu.matmul %0, %1, %cst {dimension_numbers = #tpu.dot_dimension_numbers<[1], [0], [0], [1], [0, 0, 1, 1], [], []>} : vector<16x32xf32>, vector<32x96xf32>, vector<16x96xf32> -> vector<16x96xf32>
    %c0_3 = arith.constant 0 : index
    %c0_4 = arith.constant 0 : index
    %3 = vector.load %arg3[%c0_3, %c0_4] : memref<1x96xf32, #tpu.memory_space<vmem>>, vector<1x96xf32>
    %4 = vector.broadcast %3 : vector<1x96xf32> to vector<16x96xf32>
    %5 = arith.addf %2, %4 : vector<16x96xf32>
    %c0_5 = arith.constant 0 : index
    %c0_6 = arith.constant 0 : index
    %6 = vector.load %arg4[%c0_5, %c0_6] : memref<16x96xf32, #tpu.memory_space<vmem>>, vector<16x96xf32>
    tpu.vector_store %arg4[%c0_5, %c0_6], %5 {strides = array<i32>} : memref<16x96xf32, #tpu.memory_space<vmem>>, vector<16x96xf32>,
    return
  }
  func.func @transform_0(%arg0: i32) -> (i32, i32) {
    %c0_i32 = arith.constant 0 : i32
    %c0_i32_0 = arith.constant 0 : i32
    return %arg0, %c0_i32 : i32, i32
  }
  func.func @transform_1(%arg0: i32) -> (i32, i32) {
    %c0_i32 = arith.constant 0 : i32
    %c0_i32_0 = arith.constant 0 : i32
    %c0_i32_1 = arith.constant 0 : i32
    return %c0_i32, %c0_i32_0 : i32, i32
  }
  func.func @transform_2(%arg0: i32) -> (i32, i32) {
    %c0_i32 = arith.constant 0 : i32
    %c0_i32_0 = arith.constant 0 : i32
    %c0_i32_1 = arith.constant 0 : i32
    return %c0_i32, %c0_i32_0 : i32, i32
  }
  func.func @transform_3(%arg0: i32) -> (i32, i32) {
    %c0_i32 = arith.constant 0 : i32
    %c0_i32_0 = arith.constant 0 : i32
    return %arg0, %c0_i32 : i32, i32
  }
}

module attributes {stable_mosaic.version = 11 : i64} {
  func.func @input_proj_kernel(%arg0: i32, %arg1: memref<16x16xf32, #tpu.memory_space<vmem>>, %arg2: memref<16x96xf32, #tpu.memory_space<vmem>>, %arg3: memref<1x96xf32, #tpu.memory_space<vmem>>, %arg4: memref<16x96xf32, #tpu.memory_space<vmem>>) attributes {dimension_semantics = [#tpu.dimension_semantics<parallel>], iteration_bounds = array<i64: 1>, scalar_prefetch = 0 : i64, scratch_operands = 0 : i64, tpu.core_type = #tpu.core_type<tc>, window_params = [{transform_indices = @transform_0, window_bounds = array<i64: 16, 16>}, {pipeline_mode = #tpu.pipeline_mode<synchronous>, transform_indices = @transform_1, window_bounds = array<i64: 16, 96>}, {pipeline_mode = #tpu.pipeline_mode<synchronous>, transform_indices = @transform_2, window_bounds = array<i64: 1, 96>}, {transform_indices = @transform_3, window_bounds = array<i64: 16, 96>}]} {
    %c0 = arith.constant 0 : index
    %c0_0 = arith.constant 0 : index
    %0 = vector.load %arg1[%c0, %c0_0] : memref<16x16xf32, #tpu.memory_space<vmem>>, vector<16x16xf32>
    %c0_1 = arith.constant 0 : index
    %c0_2 = arith.constant 0 : index
    %1 = vector.load %arg2[%c0_1, %c0_2] : memref<16x96xf32, #tpu.memory_space<vmem>>, vector<16x96xf32>
    %cst = arith.constant dense<0.000000e+00> : vector<16x96xf32>
    %2 = tpu.matmul %0, %1, %cst {dimension_numbers = #tpu.dot_dimension_numbers<[1], [0], [0], [1], [0, 0, 1, 1], [], []>} : vector<16x16xf32>, vector<16x96xf32>, vector<16x96xf32> -> vector<16x96xf32>
    %c0_3 = arith.constant 0 : index
    %c0_4 = arith.constant 0 : index
    %3 = vector.load %arg3[%c0_3, %c0_4] : memref<1x96xf32, #tpu.memory_space<vmem>>, vector<1x96xf32>
    %4 = vector.broadcast %3 : vector<1x96xf32> to vector<16x96xf32>
    %5 = arith.addf %2, %4 : vector<16x96xf32>
    %c0_5 = arith.constant 0 : index
    %c0_6 = arith.constant 0 : index
    %6 = vector.load %arg4[%c0_5, %c0_6] : memref<16x96xf32, #tpu.memory_space<vmem>>, vector<16x96xf32>
    tpu.vector_store %arg4[%c0_5, %c0_6], %5 {strides = array<i32>} : memref<16x96xf32, #tpu.memory_space<vmem>>, vector<16x96xf32>,
    return
  }
  func.func @transform_0(%arg0: i32) -> (i32, i32) {
    %c0_i32 = arith.constant 0 : i32
    %c0_i32_0 = arith.constant 0 : i32
    return %arg0, %c0_i32 : i32, i32
  }
  func.func @transform_1(%arg0: i32) -> (i32, i32) {
    %c0_i32 = arith.constant 0 : i32
    %c0_i32_0 = arith.constant 0 : i32
    %c0_i32_1 = arith.constant 0 : i32
    return %c0_i32, %c0_i32_0 : i32, i32
  }
  func.func @transform_2(%arg0: i32) -> (i32, i32) {
    %c0_i32 = arith.constant 0 : i32
    %c0_i32_0 = arith.constant 0 : i32
    %c0_i32_1 = arith.constant 0 : i32
    return %c0_i32, %c0_i32_0 : i32, i32
  }
  func.func @transform_3(%arg0: i32) -> (i32, i32) {
    %c0_i32 = arith.constant 0 : i32
    %c0_i32_0 = arith.constant 0 : i32
    return %arg0, %c0_i32 : i32, i32
  }
}

module attributes {stable_mosaic.version = 11 : i64} {
  func.func @gru_chunk_kernel(%arg0: i32, %arg1: i32, %arg2: memref<8x2x96xf32, #tpu.memory_space<vmem>>, %arg3: memref<32x96xf32, #tpu.memory_space<vmem>>, %arg4: memref<1x32xf32, #tpu.memory_space<vmem>>, %arg5: memref<8x2x32xf32, #tpu.memory_space<vmem>>, %arg6: memref<2x32xf32, #tpu.memory_space<vmem>>) attributes {dimension_semantics = [#tpu.dimension_semantics<parallel>, #tpu.dimension_semantics<arbitrary>], iteration_bounds = array<i64: 1, 1>, scalar_prefetch = 0 : i64, scratch_operands = 1 : i64, tpu.core_type = #tpu.core_type<tc>, window_params = [{transform_indices = @transform_0, window_bounds = array<i64: 8, 2, 96>}, {pipeline_mode = #tpu.pipeline_mode<synchronous>, transform_indices = @transform_1, window_bounds = array<i64: 32, 96>}, {pipeline_mode = #tpu.pipeline_mode<synchronous>, transform_indices = @transform_2, window_bounds = array<i64: 1, 32>}, {transform_indices = @transform_3, window_bounds = array<i64: 8, 2, 32>}]} {
    %c0_i32 = arith.constant 0 : i32
    %0 = arith.cmpi eq, %arg1, %c0_i32 : i32
    %1 = arith.extui %0 : i1 to i32
    %c0_i32_0 = arith.constant 0 : i32
    %2 = arith.cmpi ne, %1, %c0_i32_0 : i32
    scf.if %2 {
      %cst_64 = arith.constant 0.000000e+00 : f32
      %279 = vector.broadcast %cst_64 : f32 to vector<2x32xf32>
      %c0_65 = arith.constant 0 : index
      %c0_66 = arith.constant 0 : index
      %280 = vector.load %arg6[%c0_65, %c0_66] : memref<2x32xf32, #tpu.memory_space<vmem>>, vector<2x32xf32>
      tpu.vector_store %arg6[%c0_65, %c0_66], %279 {strides = array<i32>} : memref<2x32xf32, #tpu.memory_space<vmem>>, vector<2x32xf32>,
    } else {
    }
    %c0 = arith.constant 0 : index
    %c0_1 = arith.constant 0 : index
    %3 = vector.load %arg3[%c0, %c0_1] : memref<32x96xf32, #tpu.memory_space<vmem>>, vector<32x96xf32>
    %c0_2 = arith.constant 0 : index
    %c0_3 = arith.constant 0 : index
    %4 = vector.load %arg4[%c0_2, %c0_3] : memref<1x32xf32, #tpu.memory_space<vmem>>, vector<1x32xf32>
    %c0_4 = arith.constant 0 : index
    %c0_5 = arith.constant 0 : index
    %5 = vector.load %arg6[%c0_4, %c0_5] : memref<2x32xf32, #tpu.memory_space<vmem>>, vector<2x32xf32>
    %c0_i32_6 = arith.constant 0 : i32
    %cst = arith.constant dense<0.000000e+00> : vector<2x96xf32>
    %6 = tpu.matmul %5, %3, %cst {dimension_numbers = #tpu.dot_dimension_numbers<[1], [0], [0], [1], [0, 0, 1, 1], [], []>} : vector<2x32xf32>, vector<32x96xf32>, vector<2x96xf32> -> vector<2x96xf32>
    %7 = arith.index_cast %c0_i32_6 : i32 to index
    %c0_7 = arith.constant 0 : index
    %c0_8 = arith.constant 0 : index
    %8 = vector.load %arg2[%7, %c0_7, %c0_8] : memref<8x2x96xf32, #tpu.memory_space<vmem>>, vector<1x2x96xf32>
    %9 = vector.shape_cast %8 : vector<1x2x96xf32> to vector<2x96xf32>
    %10 = vector.extract_strided_slice %9 {offsets = [0, 0], sizes = [2, 32], strides = [1, 1]} : vector<2x96xf32> to vector<2x32xf32>
    %11 = vector.extract_strided_slice %6 {offsets = [0, 0], sizes = [2, 32], strides = [1, 1]} : vector<2x96xf32> to vector<2x32xf32>
    %12 = arith.addf %10, %11 : vector<2x32xf32>
    %13 = arith.negf %12 : vector<2x32xf32>
    %14 = math.exp %13 : vector<2x32xf32>
    %cst_9 = arith.constant 1.000000e+00 : f32
    %15 = vector.broadcast %cst_9 : f32 to vector<2x32xf32>
    %16 = arith.addf %15, %14 : vector<2x32xf32>
    %17 = arith.divf %15, %16 : vector<2x32xf32>
    %18 = vector.extract_strided_slice %9 {offsets = [0, 32], sizes = [2, 32], strides = [1, 1]} : vector<2x96xf32> to vector<2x32xf32>
    %19 = vector.extract_strided_slice %6 {offsets = [0, 32], sizes = [2, 32], strides = [1, 1]} : vector<2x96xf32> to vector<2x32xf32>
    %20 = arith.addf %18, %19 : vector<2x32xf32>
    %21 = arith.negf %20 : vector<2x32xf32>
    %22 = math.exp %21 : vector<2x32xf32>
    %cst_10 = arith.constant 1.000000e+00 : f32
    %23 = vector.broadcast %cst_10 : f32 to vector<2x32xf32>
    %24 = arith.addf %23, %22 : vector<2x32xf32>
    %25 = arith.divf %23, %24 : vector<2x32xf32>
    %26 = vector.extract_strided_slice %9 {offsets = [0, 64], sizes = [2, 32], strides = [1, 1]} : vector<2x96xf32> to vector<2x32xf32>
    %27 = vector.extract_strided_slice %6 {offsets = [0, 64], sizes = [2, 32], strides = [1, 1]} : vector<2x96xf32> to vector<2x32xf32>
    %28 = vector.broadcast %4 : vector<1x32xf32> to vector<2x32xf32>
    %29 = arith.addf %27, %28 : vector<2x32xf32>
    %30 = arith.mulf %17, %29 : vector<2x32xf32>
    %31 = arith.addf %26, %30 : vector<2x32xf32>
    %32 = math.tanh %31 : vector<2x32xf32>
    %33 = arith.subf %5, %32 : vector<2x32xf32>
    %34 = arith.mulf %25, %33 : vector<2x32xf32>
    %35 = arith.addf %32, %34 : vector<2x32xf32>
    %36 = arith.index_cast %c0_i32_6 : i32 to index
    %c0_11 = arith.constant 0 : index
    %c0_12 = arith.constant 0 : index
    %37 = vector.load %arg5[%36, %c0_11, %c0_12] : memref<8x2x32xf32, #tpu.memory_space<vmem>>, vector<1x2x32xf32>
    %38 = vector.shape_cast %37 : vector<1x2x32xf32> to vector<2x32xf32>
    %39 = vector.shape_cast %35 : vector<2x32xf32> to vector<1x2x32xf32>
    tpu.vector_store %arg5[%36, %c0_11, %c0_12], %39 {strides = array<i32>} : memref<8x2x32xf32, #tpu.memory_space<vmem>>, vector<1x2x32xf32>,
    %c1_i32 = arith.constant 1 : i32
    %cst_13 = arith.constant dense<0.000000e+00> : vector<2x96xf32>
    %40 = tpu.matmul %35, %3, %cst_13 {dimension_numbers = #tpu.dot_dimension_numbers<[1], [0], [0], [1], [0, 0, 1, 1], [], []>} : vector<2x32xf32>, vector<32x96xf32>, vector<2x96xf32> -> vector<2x96xf32>
    %41 = arith.index_cast %c1_i32 : i32 to index
    %c0_14 = arith.constant 0 : index
    %c0_15 = arith.constant 0 : index
    %42 = vector.load %arg2[%41, %c0_14, %c0_15] : memref<8x2x96xf32, #tpu.memory_space<vmem>>, vector<1x2x96xf32>
    %43 = vector.shape_cast %42 : vector<1x2x96xf32> to vector<2x96xf32>
    %44 = vector.extract_strided_slice %43 {offsets = [0, 0], sizes = [2, 32], strides = [1, 1]} : vector<2x96xf32> to vector<2x32xf32>
    %45 = vector.extract_strided_slice %40 {offsets = [0, 0], sizes = [2, 32], strides = [1, 1]} : vector<2x96xf32> to vector<2x32xf32>
    %46 = arith.addf %44, %45 : vector<2x32xf32>
    %47 = arith.negf %46 : vector<2x32xf32>
    %48 = math.exp %47 : vector<2x32xf32>
    %cst_16 = arith.constant 1.000000e+00 : f32
    %49 = vector.broadcast %cst_16 : f32 to vector<2x32xf32>
    %50 = arith.addf %49, %48 : vector<2x32xf32>
    %51 = arith.divf %49, %50 : vector<2x32xf32>
    %52 = vector.extract_strided_slice %43 {offsets = [0, 32], sizes = [2, 32], strides = [1, 1]} : vector<2x96xf32> to vector<2x32xf32>
    %53 = vector.extract_strided_slice %40 {offsets = [0, 32], sizes = [2, 32], strides = [1, 1]} : vector<2x96xf32> to vector<2x32xf32>
    %54 = arith.addf %52, %53 : vector<2x32xf32>
    %55 = arith.negf %54 : vector<2x32xf32>
    %56 = math.exp %55 : vector<2x32xf32>
    %cst_17 = arith.constant 1.000000e+00 : f32
    %57 = vector.broadcast %cst_17 : f32 to vector<2x32xf32>
    %58 = arith.addf %57, %56 : vector<2x32xf32>
    %59 = arith.divf %57, %58 : vector<2x32xf32>
    %60 = vector.extract_strided_slice %43 {offsets = [0, 64], sizes = [2, 32], strides = [1, 1]} : vector<2x96xf32> to vector<2x32xf32>
    %61 = vector.extract_strided_slice %40 {offsets = [0, 64], sizes = [2, 32], strides = [1, 1]} : vector<2x96xf32> to vector<2x32xf32>
    %62 = vector.broadcast %4 : vector<1x32xf32> to vector<2x32xf32>
    %63 = arith.addf %61, %62 : vector<2x32xf32>
    %64 = arith.mulf %51, %63 : vector<2x32xf32>
    %65 = arith.addf %60, %64 : vector<2x32xf32>
    %66 = math.tanh %65 : vector<2x32xf32>
    %67 = arith.subf %35, %66 : vector<2x32xf32>
    %68 = arith.mulf %59, %67 : vector<2x32xf32>
    %69 = arith.addf %66, %68 : vector<2x32xf32>
    %70 = arith.index_cast %c1_i32 : i32 to index
    %c0_18 = arith.constant 0 : index
    %c0_19 = arith.constant 0 : index
    %71 = vector.load %arg5[%70, %c0_18, %c0_19] : memref<8x2x32xf32, #tpu.memory_space<vmem>>, vector<1x2x32xf32>
    %72 = vector.shape_cast %71 : vector<1x2x32xf32> to vector<2x32xf32>
    %73 = vector.shape_cast %69 : vector<2x32xf32> to vector<1x2x32xf32>
    tpu.vector_store %arg5[%70, %c0_18, %c0_19], %73 {strides = array<i32>} : memref<8x2x32xf32, #tpu.memory_space<vmem>>, vector<1x2x32xf32>,
    %c2_i32 = arith.constant 2 : i32
    %cst_20 = arith.constant dense<0.000000e+00> : vector<2x96xf32>
    %74 = tpu.matmul %69, %3, %cst_20 {dimension_numbers = #tpu.dot_dimension_numbers<[1], [0], [0], [1], [0, 0, 1, 1], [], []>} : vector<2x32xf32>, vector<32x96xf32>, vector<2x96xf32> -> vector<2x96xf32>
    %75 = arith.index_cast %c2_i32 : i32 to index
    %c0_21 = arith.constant 0 : index
    %c0_22 = arith.constant 0 : index
    %76 = vector.load %arg2[%75, %c0_21, %c0_22] : memref<8x2x96xf32, #tpu.memory_space<vmem>>, vector<1x2x96xf32>
    %77 = vector.shape_cast %76 : vector<1x2x96xf32> to vector<2x96xf32>
    %78 = vector.extract_strided_slice %77 {offsets = [0, 0], sizes = [2, 32], strides = [1, 1]} : vector<2x96xf32> to vector<2x32xf32>
    %79 = vector.extract_strided_slice %74 {offsets = [0, 0], sizes = [2, 32], strides = [1, 1]} : vector<2x96xf32> to vector<2x32xf32>
    %80 = arith.addf %78, %79 : vector<2x32xf32>
    %81 = arith.negf %80 : vector<2x32xf32>
    %82 = math.exp %81 : vector<2x32xf32>
    %cst_23 = arith.constant 1.000000e+00 : f32
    %83 = vector.broadcast %cst_23 : f32 to vector<2x32xf32>
    %84 = arith.addf %83, %82 : vector<2x32xf32>
    %85 = arith.divf %83, %84 : vector<2x32xf32>
    %86 = vector.extract_strided_slice %77 {offsets = [0, 32], sizes = [2, 32], strides = [1, 1]} : vector<2x96xf32> to vector<2x32xf32>
    %87 = vector.extract_strided_slice %74 {offsets = [0, 32], sizes = [2, 32], strides = [1, 1]} : vector<2x96xf32> to vector<2x32xf32>
    %88 = arith.addf %86, %87 : vector<2x32xf32>
    %89 = arith.negf %88 : vector<2x32xf32>
    %90 = math.exp %89 : vector<2x32xf32>
    %cst_24 = arith.constant 1.000000e+00 : f32
    %91 = vector.broadcast %cst_24 : f32 to vector<2x32xf32>
    %92 = arith.addf %91, %90 : vector<2x32xf32>
    %93 = arith.divf %91, %92 : vector<2x32xf32>
    %94 = vector.extract_strided_slice %77 {offsets = [0, 64], sizes = [2, 32], strides = [1, 1]} : vector<2x96xf32> to vector<2x32xf32>
    %95 = vector.extract_strided_slice %74 {offsets = [0, 64], sizes = [2, 32], strides = [1, 1]} : vector<2x96xf32> to vector<2x32xf32>
    %96 = vector.broadcast %4 : vector<1x32xf32> to vector<2x32xf32>
    %97 = arith.addf %95, %96 : vector<2x32xf32>
    %98 = arith.mulf %85, %97 : vector<2x32xf32>
    %99 = arith.addf %94, %98 : vector<2x32xf32>
    %100 = math.tanh %99 : vector<2x32xf32>
    %101 = arith.subf %69, %100 : vector<2x32xf32>
    %102 = arith.mulf %93, %101 : vector<2x32xf32>
    %103 = arith.addf %100, %102 : vector<2x32xf32>
    %104 = arith.index_cast %c2_i32 : i32 to index
    %c0_25 = arith.constant 0 : index
    %c0_26 = arith.constant 0 : index
    %105 = vector.load %arg5[%104, %c0_25, %c0_26] : memref<8x2x32xf32, #tpu.memory_space<vmem>>, vector<1x2x32xf32>
    %106 = vector.shape_cast %105 : vector<1x2x32xf32> to vector<2x32xf32>
    %107 = vector.shape_cast %103 : vector<2x32xf32> to vector<1x2x32xf32>
    tpu.vector_store %arg5[%104, %c0_25, %c0_26], %107 {strides = array<i32>} : memref<8x2x32xf32, #tpu.memory_space<vmem>>, vector<1x2x32xf32>,
    %c3_i32 = arith.constant 3 : i32
    %cst_27 = arith.constant dense<0.000000e+00> : vector<2x96xf32>
    %108 = tpu.matmul %103, %3, %cst_27 {dimension_numbers = #tpu.dot_dimension_numbers<[1], [0], [0], [1], [0, 0, 1, 1], [], []>} : vector<2x32xf32>, vector<32x96xf32>, vector<2x96xf32> -> vector<2x96xf32>
    %109 = arith.index_cast %c3_i32 : i32 to index
    %c0_28 = arith.constant 0 : index
    %c0_29 = arith.constant 0 : index
    %110 = vector.load %arg2[%109, %c0_28, %c0_29] : memref<8x2x96xf32, #tpu.memory_space<vmem>>, vector<1x2x96xf32>
    %111 = vector.shape_cast %110 : vector<1x2x96xf32> to vector<2x96xf32>
    %112 = vector.extract_strided_slice %111 {offsets = [0, 0], sizes = [2, 32], strides = [1, 1]} : vector<2x96xf32> to vector<2x32xf32>
    %113 = vector.extract_strided_slice %108 {offsets = [0, 0], sizes = [2, 32], strides = [1, 1]} : vector<2x96xf32> to vector<2x32xf32>
    %114 = arith.addf %112, %113 : vector<2x32xf32>
    %115 = arith.negf %114 : vector<2x32xf32>
    %116 = math.exp %115 : vector<2x32xf32>
    %cst_30 = arith.constant 1.000000e+00 : f32
    %117 = vector.broadcast %cst_30 : f32 to vector<2x32xf32>
    %118 = arith.addf %117, %116 : vector<2x32xf32>
    %119 = arith.divf %117, %118 : vector<2x32xf32>
    %120 = vector.extract_strided_slice %111 {offsets = [0, 32], sizes = [2, 32], strides = [1, 1]} : vector<2x96xf32> to vector<2x32xf32>
    %121 = vector.extract_strided_slice %108 {offsets = [0, 32], sizes = [2, 32], strides = [1, 1]} : vector<2x96xf32> to vector<2x32xf32>
    %122 = arith.addf %120, %121 : vector<2x32xf32>
    %123 = arith.negf %122 : vector<2x32xf32>
    %124 = math.exp %123 : vector<2x32xf32>
    %cst_31 = arith.constant 1.000000e+00 : f32
    %125 = vector.broadcast %cst_31 : f32 to vector<2x32xf32>
    %126 = arith.addf %125, %124 : vector<2x32xf32>
    %127 = arith.divf %125, %126 : vector<2x32xf32>
    %128 = vector.extract_strided_slice %111 {offsets = [0, 64], sizes = [2, 32], strides = [1, 1]} : vector<2x96xf32> to vector<2x32xf32>
    %129 = vector.extract_strided_slice %108 {offsets = [0, 64], sizes = [2, 32], strides = [1, 1]} : vector<2x96xf32> to vector<2x32xf32>
    %130 = vector.broadcast %4 : vector<1x32xf32> to vector<2x32xf32>
    %131 = arith.addf %129, %130 : vector<2x32xf32>
    %132 = arith.mulf %119, %131 : vector<2x32xf32>
    %133 = arith.addf %128, %132 : vector<2x32xf32>
    %134 = math.tanh %133 : vector<2x32xf32>
    %135 = arith.subf %103, %134 : vector<2x32xf32>
    %136 = arith.mulf %127, %135 : vector<2x32xf32>
    %137 = arith.addf %134, %136 : vector<2x32xf32>
    %138 = arith.index_cast %c3_i32 : i32 to index
    %c0_32 = arith.constant 0 : index
    %c0_33 = arith.constant 0 : index
    %139 = vector.load %arg5[%138, %c0_32, %c0_33] : memref<8x2x32xf32, #tpu.memory_space<vmem>>, vector<1x2x32xf32>
    %140 = vector.shape_cast %139 : vector<1x2x32xf32> to vector<2x32xf32>
    %141 = vector.shape_cast %137 : vector<2x32xf32> to vector<1x2x32xf32>
    tpu.vector_store %arg5[%138, %c0_32, %c0_33], %141 {strides = array<i32>} : memref<8x2x32xf32, #tpu.memory_space<vmem>>, vector<1x2x32xf32>,
    %c4_i32 = arith.constant 4 : i32
    %cst_34 = arith.constant dense<0.000000e+00> : vector<2x96xf32>
    %142 = tpu.matmul %137, %3, %cst_34 {dimension_numbers = #tpu.dot_dimension_numbers<[1], [0], [0], [1], [0, 0, 1, 1], [], []>} : vector<2x32xf32>, vector<32x96xf32>, vector<2x96xf32> -> vector<2x96xf32>
    %143 = arith.index_cast %c4_i32 : i32 to index
    %c0_35 = arith.constant 0 : index
    %c0_36 = arith.constant 0 : index
    %144 = vector.load %arg2[%143, %c0_35, %c0_36] : memref<8x2x96xf32, #tpu.memory_space<vmem>>, vector<1x2x96xf32>
    %145 = vector.shape_cast %144 : vector<1x2x96xf32> to vector<2x96xf32>
    %146 = vector.extract_strided_slice %145 {offsets = [0, 0], sizes = [2, 32], strides = [1, 1]} : vector<2x96xf32> to vector<2x32xf32>
    %147 = vector.extract_strided_slice %142 {offsets = [0, 0], sizes = [2, 32], strides = [1, 1]} : vector<2x96xf32> to vector<2x32xf32>
    %148 = arith.addf %146, %147 : vector<2x32xf32>
    %149 = arith.negf %148 : vector<2x32xf32>
    %150 = math.exp %149 : vector<2x32xf32>
    %cst_37 = arith.constant 1.000000e+00 : f32
    %151 = vector.broadcast %cst_37 : f32 to vector<2x32xf32>
    %152 = arith.addf %151, %150 : vector<2x32xf32>
    %153 = arith.divf %151, %152 : vector<2x32xf32>
    %154 = vector.extract_strided_slice %145 {offsets = [0, 32], sizes = [2, 32], strides = [1, 1]} : vector<2x96xf32> to vector<2x32xf32>
    %155 = vector.extract_strided_slice %142 {offsets = [0, 32], sizes = [2, 32], strides = [1, 1]} : vector<2x96xf32> to vector<2x32xf32>
    %156 = arith.addf %154, %155 : vector<2x32xf32>
    %157 = arith.negf %156 : vector<2x32xf32>
    %158 = math.exp %157 : vector<2x32xf32>
    %cst_38 = arith.constant 1.000000e+00 : f32
    %159 = vector.broadcast %cst_38 : f32 to vector<2x32xf32>
    %160 = arith.addf %159, %158 : vector<2x32xf32>
    %161 = arith.divf %159, %160 : vector<2x32xf32>
    %162 = vector.extract_strided_slice %145 {offsets = [0, 64], sizes = [2, 32], strides = [1, 1]} : vector<2x96xf32> to vector<2x32xf32>
    %163 = vector.extract_strided_slice %142 {offsets = [0, 64], sizes = [2, 32], strides = [1, 1]} : vector<2x96xf32> to vector<2x32xf32>
    %164 = vector.broadcast %4 : vector<1x32xf32> to vector<2x32xf32>
    %165 = arith.addf %163, %164 : vector<2x32xf32>
    %166 = arith.mulf %153, %165 : vector<2x32xf32>
    %167 = arith.addf %162, %166 : vector<2x32xf32>
    %168 = math.tanh %167 : vector<2x32xf32>
    %169 = arith.subf %137, %168 : vector<2x32xf32>
    %170 = arith.mulf %161, %169 : vector<2x32xf32>
    %171 = arith.addf %168, %170 : vector<2x32xf32>
    %172 = arith.index_cast %c4_i32 : i32 to index
    %c0_39 = arith.constant 0 : index
    %c0_40 = arith.constant 0 : index
    %173 = vector.load %arg5[%172, %c0_39, %c0_40] : memref<8x2x32xf32, #tpu.memory_space<vmem>>, vector<1x2x32xf32>
    %174 = vector.shape_cast %173 : vector<1x2x32xf32> to vector<2x32xf32>
    %175 = vector.shape_cast %171 : vector<2x32xf32> to vector<1x2x32xf32>
    tpu.vector_store %arg5[%172, %c0_39, %c0_40], %175 {strides = array<i32>} : memref<8x2x32xf32, #tpu.memory_space<vmem>>, vector<1x2x32xf32>,
    %c5_i32 = arith.constant 5 : i32
    %cst_41 = arith.constant dense<0.000000e+00> : vector<2x96xf32>
    %176 = tpu.matmul %171, %3, %cst_41 {dimension_numbers = #tpu.dot_dimension_numbers<[1], [0], [0], [1], [0, 0, 1, 1], [], []>} : vector<2x32xf32>, vector<32x96xf32>, vector<2x96xf32> -> vector<2x96xf32>
    %177 = arith.index_cast %c5_i32 : i32 to index
    %c0_42 = arith.constant 0 : index
    %c0_43 = arith.constant 0 : index
    %178 = vector.load %arg2[%177, %c0_42, %c0_43] : memref<8x2x96xf32, #tpu.memory_space<vmem>>, vector<1x2x96xf32>
    %179 = vector.shape_cast %178 : vector<1x2x96xf32> to vector<2x96xf32>
    %180 = vector.extract_strided_slice %179 {offsets = [0, 0], sizes = [2, 32], strides = [1, 1]} : vector<2x96xf32> to vector<2x32xf32>
    %181 = vector.extract_strided_slice %176 {offsets = [0, 0], sizes = [2, 32], strides = [1, 1]} : vector<2x96xf32> to vector<2x32xf32>
    %182 = arith.addf %180, %181 : vector<2x32xf32>
    %183 = arith.negf %182 : vector<2x32xf32>
    %184 = math.exp %183 : vector<2x32xf32>
    %cst_44 = arith.constant 1.000000e+00 : f32
    %185 = vector.broadcast %cst_44 : f32 to vector<2x32xf32>
    %186 = arith.addf %185, %184 : vector<2x32xf32>
    %187 = arith.divf %185, %186 : vector<2x32xf32>
    %188 = vector.extract_strided_slice %179 {offsets = [0, 32], sizes = [2, 32], strides = [1, 1]} : vector<2x96xf32> to vector<2x32xf32>
    %189 = vector.extract_strided_slice %176 {offsets = [0, 32], sizes = [2, 32], strides = [1, 1]} : vector<2x96xf32> to vector<2x32xf32>
    %190 = arith.addf %188, %189 : vector<2x32xf32>
    %191 = arith.negf %190 : vector<2x32xf32>
    %192 = math.exp %191 : vector<2x32xf32>
    %cst_45 = arith.constant 1.000000e+00 : f32
    %193 = vector.broadcast %cst_45 : f32 to vector<2x32xf32>
    %194 = arith.addf %193, %192 : vector<2x32xf32>
    %195 = arith.divf %193, %194 : vector<2x32xf32>
    %196 = vector.extract_strided_slice %179 {offsets = [0, 64], sizes = [2, 32], strides = [1, 1]} : vector<2x96xf32> to vector<2x32xf32>
    %197 = vector.extract_strided_slice %176 {offsets = [0, 64], sizes = [2, 32], strides = [1, 1]} : vector<2x96xf32> to vector<2x32xf32>
    %198 = vector.broadcast %4 : vector<1x32xf32> to vector<2x32xf32>
    %199 = arith.addf %197, %198 : vector<2x32xf32>
    %200 = arith.mulf %187, %199 : vector<2x32xf32>
    %201 = arith.addf %196, %200 : vector<2x32xf32>
    %202 = math.tanh %201 : vector<2x32xf32>
    %203 = arith.subf %171, %202 : vector<2x32xf32>
    %204 = arith.mulf %195, %203 : vector<2x32xf32>
    %205 = arith.addf %202, %204 : vector<2x32xf32>
    %206 = arith.index_cast %c5_i32 : i32 to index
    %c0_46 = arith.constant 0 : index
    %c0_47 = arith.constant 0 : index
    %207 = vector.load %arg5[%206, %c0_46, %c0_47] : memref<8x2x32xf32, #tpu.memory_space<vmem>>, vector<1x2x32xf32>
    %208 = vector.shape_cast %207 : vector<1x2x32xf32> to vector<2x32xf32>
    %209 = vector.shape_cast %205 : vector<2x32xf32> to vector<1x2x32xf32>
    tpu.vector_store %arg5[%206, %c0_46, %c0_47], %209 {strides = array<i32>} : memref<8x2x32xf32, #tpu.memory_space<vmem>>, vector<1x2x32xf32>,
    %c6_i32 = arith.constant 6 : i32
    %cst_48 = arith.constant dense<0.000000e+00> : vector<2x96xf32>
    %210 = tpu.matmul %205, %3, %cst_48 {dimension_numbers = #tpu.dot_dimension_numbers<[1], [0], [0], [1], [0, 0, 1, 1], [], []>} : vector<2x32xf32>, vector<32x96xf32>, vector<2x96xf32> -> vector<2x96xf32>
    %211 = arith.index_cast %c6_i32 : i32 to index
    %c0_49 = arith.constant 0 : index
    %c0_50 = arith.constant 0 : index
    %212 = vector.load %arg2[%211, %c0_49, %c0_50] : memref<8x2x96xf32, #tpu.memory_space<vmem>>, vector<1x2x96xf32>
    %213 = vector.shape_cast %212 : vector<1x2x96xf32> to vector<2x96xf32>
    %214 = vector.extract_strided_slice %213 {offsets = [0, 0], sizes = [2, 32], strides = [1, 1]} : vector<2x96xf32> to vector<2x32xf32>
    %215 = vector.extract_strided_slice %210 {offsets = [0, 0], sizes = [2, 32], strides = [1, 1]} : vector<2x96xf32> to vector<2x32xf32>
    %216 = arith.addf %214, %215 : vector<2x32xf32>
    %217 = arith.negf %216 : vector<2x32xf32>
    %218 = math.exp %217 : vector<2x32xf32>
    %cst_51 = arith.constant 1.000000e+00 : f32
    %219 = vector.broadcast %cst_51 : f32 to vector<2x32xf32>
    %220 = arith.addf %219, %218 : vector<2x32xf32>
    %221 = arith.divf %219, %220 : vector<2x32xf32>
    %222 = vector.extract_strided_slice %213 {offsets = [0, 32], sizes = [2, 32], strides = [1, 1]} : vector<2x96xf32> to vector<2x32xf32>
    %223 = vector.extract_strided_slice %210 {offsets = [0, 32], sizes = [2, 32], strides = [1, 1]} : vector<2x96xf32> to vector<2x32xf32>
    %224 = arith.addf %222, %223 : vector<2x32xf32>
    %225 = arith.negf %224 : vector<2x32xf32>
    %226 = math.exp %225 : vector<2x32xf32>
    %cst_52 = arith.constant 1.000000e+00 : f32
    %227 = vector.broadcast %cst_52 : f32 to vector<2x32xf32>
    %228 = arith.addf %227, %226 : vector<2x32xf32>
    %229 = arith.divf %227, %228 : vector<2x32xf32>
    %230 = vector.extract_strided_slice %213 {offsets = [0, 64], sizes = [2, 32], strides = [1, 1]} : vector<2x96xf32> to vector<2x32xf32>
    %231 = vector.extract_strided_slice %210 {offsets = [0, 64], sizes = [2, 32], strides = [1, 1]} : vector<2x96xf32> to vector<2x32xf32>
    %232 = vector.broadcast %4 : vector<1x32xf32> to vector<2x32xf32>
    %233 = arith.addf %231, %232 : vector<2x32xf32>
    %234 = arith.mulf %221, %233 : vector<2x32xf32>
    %235 = arith.addf %230, %234 : vector<2x32xf32>
    %236 = math.tanh %235 : vector<2x32xf32>
    %237 = arith.subf %205, %236 : vector<2x32xf32>
    %238 = arith.mulf %229, %237 : vector<2x32xf32>
    %239 = arith.addf %236, %238 : vector<2x32xf32>
    %240 = arith.index_cast %c6_i32 : i32 to index
    %c0_53 = arith.constant 0 : index
    %c0_54 = arith.constant 0 : index
    %241 = vector.load %arg5[%240, %c0_53, %c0_54] : memref<8x2x32xf32, #tpu.memory_space<vmem>>, vector<1x2x32xf32>
    %242 = vector.shape_cast %241 : vector<1x2x32xf32> to vector<2x32xf32>
    %243 = vector.shape_cast %239 : vector<2x32xf32> to vector<1x2x32xf32>
    tpu.vector_store %arg5[%240, %c0_53, %c0_54], %243 {strides = array<i32>} : memref<8x2x32xf32, #tpu.memory_space<vmem>>, vector<1x2x32xf32>,
    %c7_i32 = arith.constant 7 : i32
    %cst_55 = arith.constant dense<0.000000e+00> : vector<2x96xf32>
    %244 = tpu.matmul %239, %3, %cst_55 {dimension_numbers = #tpu.dot_dimension_numbers<[1], [0], [0], [1], [0, 0, 1, 1], [], []>} : vector<2x32xf32>, vector<32x96xf32>, vector<2x96xf32> -> vector<2x96xf32>
    %245 = arith.index_cast %c7_i32 : i32 to index
    %c0_56 = arith.constant 0 : index
    %c0_57 = arith.constant 0 : index
    %246 = vector.load %arg2[%245, %c0_56, %c0_57] : memref<8x2x96xf32, #tpu.memory_space<vmem>>, vector<1x2x96xf32>
    %247 = vector.shape_cast %246 : vector<1x2x96xf32> to vector<2x96xf32>
    %248 = vector.extract_strided_slice %247 {offsets = [0, 0], sizes = [2, 32], strides = [1, 1]} : vector<2x96xf32> to vector<2x32xf32>
    %249 = vector.extract_strided_slice %244 {offsets = [0, 0], sizes = [2, 32], strides = [1, 1]} : vector<2x96xf32> to vector<2x32xf32>
    %250 = arith.addf %248, %249 : vector<2x32xf32>
    %251 = arith.negf %250 : vector<2x32xf32>
    %252 = math.exp %251 : vector<2x32xf32>
    %cst_58 = arith.constant 1.000000e+00 : f32
    %253 = vector.broadcast %cst_58 : f32 to vector<2x32xf32>
    %254 = arith.addf %253, %252 : vector<2x32xf32>
    %255 = arith.divf %253, %254 : vector<2x32xf32>
    %256 = vector.extract_strided_slice %247 {offsets = [0, 32], sizes = [2, 32], strides = [1, 1]} : vector<2x96xf32> to vector<2x32xf32>
    %257 = vector.extract_strided_slice %244 {offsets = [0, 32], sizes = [2, 32], strides = [1, 1]} : vector<2x96xf32> to vector<2x32xf32>
    %258 = arith.addf %256, %257 : vector<2x32xf32>
    %259 = arith.negf %258 : vector<2x32xf32>
    %260 = math.exp %259 : vector<2x32xf32>
    %cst_59 = arith.constant 1.000000e+00 : f32
    %261 = vector.broadcast %cst_59 : f32 to vector<2x32xf32>
    %262 = arith.addf %261, %260 : vector<2x32xf32>
    %263 = arith.divf %261, %262 : vector<2x32xf32>
    %264 = vector.extract_strided_slice %247 {offsets = [0, 64], sizes = [2, 32], strides = [1, 1]} : vector<2x96xf32> to vector<2x32xf32>
    %265 = vector.extract_strided_slice %244 {offsets = [0, 64], sizes = [2, 32], strides = [1, 1]} : vector<2x96xf32> to vector<2x32xf32>
    %266 = vector.broadcast %4 : vector<1x32xf32> to vector<2x32xf32>
    %267 = arith.addf %265, %266 : vector<2x32xf32>
    %268 = arith.mulf %255, %267 : vector<2x32xf32>
    %269 = arith.addf %264, %268 : vector<2x32xf32>
    %270 = math.tanh %269 : vector<2x32xf32>
    %271 = arith.subf %239, %270 : vector<2x32xf32>
    %272 = arith.mulf %263, %271 : vector<2x32xf32>
    %273 = arith.addf %270, %272 : vector<2x32xf32>
    %274 = arith.index_cast %c7_i32 : i32 to index
    %c0_60 = arith.constant 0 : index
    %c0_61 = arith.constant 0 : index
    %275 = vector.load %arg5[%274, %c0_60, %c0_61] : memref<8x2x32xf32, #tpu.memory_space<vmem>>, vector<1x2x32xf32>
    %276 = vector.shape_cast %275 : vector<1x2x32xf32> to vector<2x32xf32>
    %277 = vector.shape_cast %273 : vector<2x32xf32> to vector<1x2x32xf32>
    tpu.vector_store %arg5[%274, %c0_60, %c0_61], %277 {strides = array<i32>} : memref<8x2x32xf32, #tpu.memory_space<vmem>>, vector<1x2x32xf32>,
    %c8_i32 = arith.constant 8 : i32
    %c0_62 = arith.constant 0 : index
    %c0_63 = arith.constant 0 : index
    %278 = vector.load %arg6[%c0_62, %c0_63] : memref<2x32xf32, #tpu.memory_space<vmem>>, vector<2x32xf32>
    tpu.vector_store %arg6[%c0_62, %c0_63], %273 {strides = array<i32>} : memref<2x32xf32, #tpu.memory_space<vmem>>, vector<2x32xf32>,
    return
  }
  func.func @transform_0(%arg0: i32, %arg1: i32) -> (i32, i32, i32) {
    %c0_i32 = arith.constant 0 : i32
    %c0_i32_0 = arith.constant 0 : i32
    return %arg1, %arg0, %c0_i32 : i32, i32, i32
  }
  func.func @transform_1(%arg0: i32, %arg1: i32) -> (i32, i32) {
    %c0_i32 = arith.constant 0 : i32
    %c0_i32_0 = arith.constant 0 : i32
    %c0_i32_1 = arith.constant 0 : i32
    return %c0_i32, %c0_i32_0 : i32, i32
  }
  func.func @transform_2(%arg0: i32, %arg1: i32) -> (i32, i32) {
    %c0_i32 = arith.constant 0 : i32
    %c0_i32_0 = arith.constant 0 : i32
    %c0_i32_1 = arith.constant 0 : i32
    return %c0_i32, %c0_i32_0 : i32, i32
  }
  func.func @transform_3(%arg0: i32, %arg1: i32) -> (i32, i32, i32) {
    %c0_i32 = arith.constant 0 : i32
    %c0_i32_0 = arith.constant 0 : i32
    return %arg1, %arg0, %c0_i32 : i32, i32, i32
  }
}

module attributes {stable_mosaic.version = 11 : i64} {
  func.func @gru_chunk_fc_kernel(%arg0: i32, %arg1: i32, %arg2: memref<8x2x96xf32, #tpu.memory_space<vmem>>, %arg3: memref<32x96xf32, #tpu.memory_space<vmem>>, %arg4: memref<1x32xf32, #tpu.memory_space<vmem>>, %arg5: memref<32x8xf32, #tpu.memory_space<vmem>>, %arg6: memref<1x8xf32, #tpu.memory_space<vmem>>, %arg7: memref<2x8xf32, #tpu.memory_space<vmem>>, %arg8: memref<2x32xf32, #tpu.memory_space<vmem>>) attributes {dimension_semantics = [#tpu.dimension_semantics<parallel>, #tpu.dimension_semantics<arbitrary>], iteration_bounds = array<i64: 1, 1>, scalar_prefetch = 0 : i64, scratch_operands = 1 : i64, tpu.core_type = #tpu.core_type<tc>, window_params = [{transform_indices = @transform_0, window_bounds = array<i64: 8, 2, 96>}, {pipeline_mode = #tpu.pipeline_mode<synchronous>, transform_indices = @transform_1, window_bounds = array<i64: 32, 96>}, {pipeline_mode = #tpu.pipeline_mode<synchronous>, transform_indices = @transform_2, window_bounds = array<i64: 1, 32>}, {pipeline_mode = #tpu.pipeline_mode<synchronous>, transform_indices = @transform_3, window_bounds = array<i64: 32, 8>}, {pipeline_mode = #tpu.pipeline_mode<synchronous>, transform_indices = @transform_4, window_bounds = array<i64: 1, 8>}, {transform_indices = @transform_5, window_bounds = array<i64: 2, 8>}]} {
    %c0_i32 = arith.constant 0 : i32
    %0 = arith.cmpi eq, %arg1, %c0_i32 : i32
    %1 = arith.extui %0 : i1 to i32
    %c0_i32_0 = arith.constant 0 : i32
    %2 = arith.cmpi ne, %1, %c0_i32_0 : i32
    scf.if %2 {
      %cst_50 = arith.constant 0.000000e+00 : f32
      %250 = vector.broadcast %cst_50 : f32 to vector<2x32xf32>
      %c0_51 = arith.constant 0 : index
      %c0_52 = arith.constant 0 : index
      %251 = vector.load %arg8[%c0_51, %c0_52] : memref<2x32xf32, #tpu.memory_space<vmem>>, vector<2x32xf32>
      tpu.vector_store %arg8[%c0_51, %c0_52], %250 {strides = array<i32>} : memref<2x32xf32, #tpu.memory_space<vmem>>, vector<2x32xf32>,
    } else {
    }
    %c0 = arith.constant 0 : index
    %c0_1 = arith.constant 0 : index
    %3 = vector.load %arg3[%c0, %c0_1] : memref<32x96xf32, #tpu.memory_space<vmem>>, vector<32x96xf32>
    %c0_2 = arith.constant 0 : index
    %c0_3 = arith.constant 0 : index
    %4 = vector.load %arg4[%c0_2, %c0_3] : memref<1x32xf32, #tpu.memory_space<vmem>>, vector<1x32xf32>
    %c0_4 = arith.constant 0 : index
    %c0_5 = arith.constant 0 : index
    %5 = vector.load %arg8[%c0_4, %c0_5] : memref<2x32xf32, #tpu.memory_space<vmem>>, vector<2x32xf32>
    %c0_i32_6 = arith.constant 0 : i32
    %cst = arith.constant dense<0.000000e+00> : vector<2x96xf32>
    %6 = tpu.matmul %5, %3, %cst {dimension_numbers = #tpu.dot_dimension_numbers<[1], [0], [0], [1], [0, 0, 1, 1], [], []>} : vector<2x32xf32>, vector<32x96xf32>, vector<2x96xf32> -> vector<2x96xf32>
    %7 = arith.index_cast %c0_i32_6 : i32 to index
    %c0_7 = arith.constant 0 : index
    %c0_8 = arith.constant 0 : index
    %8 = vector.load %arg2[%7, %c0_7, %c0_8] : memref<8x2x96xf32, #tpu.memory_space<vmem>>, vector<1x2x96xf32>
    %9 = vector.shape_cast %8 : vector<1x2x96xf32> to vector<2x96xf32>
    %10 = vector.extract_strided_slice %9 {offsets = [0, 0], sizes = [2, 32], strides = [1, 1]} : vector<2x96xf32> to vector<2x32xf32>
    %11 = vector.extract_strided_slice %6 {offsets = [0, 0], sizes = [2, 32], strides = [1, 1]} : vector<2x96xf32> to vector<2x32xf32>
    %12 = arith.addf %10, %11 : vector<2x32xf32>
    %13 = arith.negf %12 : vector<2x32xf32>
    %14 = math.exp %13 : vector<2x32xf32>
    %cst_9 = arith.constant 1.000000e+00 : f32
    %15 = vector.broadcast %cst_9 : f32 to vector<2x32xf32>
    %16 = arith.addf %15, %14 : vector<2x32xf32>
    %17 = arith.divf %15, %16 : vector<2x32xf32>
    %18 = vector.extract_strided_slice %9 {offsets = [0, 32], sizes = [2, 32], strides = [1, 1]} : vector<2x96xf32> to vector<2x32xf32>
    %19 = vector.extract_strided_slice %6 {offsets = [0, 32], sizes = [2, 32], strides = [1, 1]} : vector<2x96xf32> to vector<2x32xf32>
    %20 = arith.addf %18, %19 : vector<2x32xf32>
    %21 = arith.negf %20 : vector<2x32xf32>
    %22 = math.exp %21 : vector<2x32xf32>
    %cst_10 = arith.constant 1.000000e+00 : f32
    %23 = vector.broadcast %cst_10 : f32 to vector<2x32xf32>
    %24 = arith.addf %23, %22 : vector<2x32xf32>
    %25 = arith.divf %23, %24 : vector<2x32xf32>
    %26 = vector.extract_strided_slice %9 {offsets = [0, 64], sizes = [2, 32], strides = [1, 1]} : vector<2x96xf32> to vector<2x32xf32>
    %27 = vector.extract_strided_slice %6 {offsets = [0, 64], sizes = [2, 32], strides = [1, 1]} : vector<2x96xf32> to vector<2x32xf32>
    %28 = vector.broadcast %4 : vector<1x32xf32> to vector<2x32xf32>
    %29 = arith.addf %27, %28 : vector<2x32xf32>
    %30 = arith.mulf %17, %29 : vector<2x32xf32>
    %31 = arith.addf %26, %30 : vector<2x32xf32>
    %32 = math.tanh %31 : vector<2x32xf32>
    %33 = arith.subf %5, %32 : vector<2x32xf32>
    %34 = arith.mulf %25, %33 : vector<2x32xf32>
    %35 = arith.addf %32, %34 : vector<2x32xf32>
    %c1_i32 = arith.constant 1 : i32
    %cst_11 = arith.constant dense<0.000000e+00> : vector<2x96xf32>
    %36 = tpu.matmul %35, %3, %cst_11 {dimension_numbers = #tpu.dot_dimension_numbers<[1], [0], [0], [1], [0, 0, 1, 1], [], []>} : vector<2x32xf32>, vector<32x96xf32>, vector<2x96xf32> -> vector<2x96xf32>
    %37 = arith.index_cast %c1_i32 : i32 to index
    %c0_12 = arith.constant 0 : index
    %c0_13 = arith.constant 0 : index
    %38 = vector.load %arg2[%37, %c0_12, %c0_13] : memref<8x2x96xf32, #tpu.memory_space<vmem>>, vector<1x2x96xf32>
    %39 = vector.shape_cast %38 : vector<1x2x96xf32> to vector<2x96xf32>
    %40 = vector.extract_strided_slice %39 {offsets = [0, 0], sizes = [2, 32], strides = [1, 1]} : vector<2x96xf32> to vector<2x32xf32>
    %41 = vector.extract_strided_slice %36 {offsets = [0, 0], sizes = [2, 32], strides = [1, 1]} : vector<2x96xf32> to vector<2x32xf32>
    %42 = arith.addf %40, %41 : vector<2x32xf32>
    %43 = arith.negf %42 : vector<2x32xf32>
    %44 = math.exp %43 : vector<2x32xf32>
    %cst_14 = arith.constant 1.000000e+00 : f32
    %45 = vector.broadcast %cst_14 : f32 to vector<2x32xf32>
    %46 = arith.addf %45, %44 : vector<2x32xf32>
    %47 = arith.divf %45, %46 : vector<2x32xf32>
    %48 = vector.extract_strided_slice %39 {offsets = [0, 32], sizes = [2, 32], strides = [1, 1]} : vector<2x96xf32> to vector<2x32xf32>
    %49 = vector.extract_strided_slice %36 {offsets = [0, 32], sizes = [2, 32], strides = [1, 1]} : vector<2x96xf32> to vector<2x32xf32>
    %50 = arith.addf %48, %49 : vector<2x32xf32>
    %51 = arith.negf %50 : vector<2x32xf32>
    %52 = math.exp %51 : vector<2x32xf32>
    %cst_15 = arith.constant 1.000000e+00 : f32
    %53 = vector.broadcast %cst_15 : f32 to vector<2x32xf32>
    %54 = arith.addf %53, %52 : vector<2x32xf32>
    %55 = arith.divf %53, %54 : vector<2x32xf32>
    %56 = vector.extract_strided_slice %39 {offsets = [0, 64], sizes = [2, 32], strides = [1, 1]} : vector<2x96xf32> to vector<2x32xf32>
    %57 = vector.extract_strided_slice %36 {offsets = [0, 64], sizes = [2, 32], strides = [1, 1]} : vector<2x96xf32> to vector<2x32xf32>
    %58 = vector.broadcast %4 : vector<1x32xf32> to vector<2x32xf32>
    %59 = arith.addf %57, %58 : vector<2x32xf32>
    %60 = arith.mulf %47, %59 : vector<2x32xf32>
    %61 = arith.addf %56, %60 : vector<2x32xf32>
    %62 = math.tanh %61 : vector<2x32xf32>
    %63 = arith.subf %35, %62 : vector<2x32xf32>
    %64 = arith.mulf %55, %63 : vector<2x32xf32>
    %65 = arith.addf %62, %64 : vector<2x32xf32>
    %c2_i32 = arith.constant 2 : i32
    %cst_16 = arith.constant dense<0.000000e+00> : vector<2x96xf32>
    %66 = tpu.matmul %65, %3, %cst_16 {dimension_numbers = #tpu.dot_dimension_numbers<[1], [0], [0], [1], [0, 0, 1, 1], [], []>} : vector<2x32xf32>, vector<32x96xf32>, vector<2x96xf32> -> vector<2x96xf32>
    %67 = arith.index_cast %c2_i32 : i32 to index
    %c0_17 = arith.constant 0 : index
    %c0_18 = arith.constant 0 : index
    %68 = vector.load %arg2[%67, %c0_17, %c0_18] : memref<8x2x96xf32, #tpu.memory_space<vmem>>, vector<1x2x96xf32>
    %69 = vector.shape_cast %68 : vector<1x2x96xf32> to vector<2x96xf32>
    %70 = vector.extract_strided_slice %69 {offsets = [0, 0], sizes = [2, 32], strides = [1, 1]} : vector<2x96xf32> to vector<2x32xf32>
    %71 = vector.extract_strided_slice %66 {offsets = [0, 0], sizes = [2, 32], strides = [1, 1]} : vector<2x96xf32> to vector<2x32xf32>
    %72 = arith.addf %70, %71 : vector<2x32xf32>
    %73 = arith.negf %72 : vector<2x32xf32>
    %74 = math.exp %73 : vector<2x32xf32>
    %cst_19 = arith.constant 1.000000e+00 : f32
    %75 = vector.broadcast %cst_19 : f32 to vector<2x32xf32>
    %76 = arith.addf %75, %74 : vector<2x32xf32>
    %77 = arith.divf %75, %76 : vector<2x32xf32>
    %78 = vector.extract_strided_slice %69 {offsets = [0, 32], sizes = [2, 32], strides = [1, 1]} : vector<2x96xf32> to vector<2x32xf32>
    %79 = vector.extract_strided_slice %66 {offsets = [0, 32], sizes = [2, 32], strides = [1, 1]} : vector<2x96xf32> to vector<2x32xf32>
    %80 = arith.addf %78, %79 : vector<2x32xf32>
    %81 = arith.negf %80 : vector<2x32xf32>
    %82 = math.exp %81 : vector<2x32xf32>
    %cst_20 = arith.constant 1.000000e+00 : f32
    %83 = vector.broadcast %cst_20 : f32 to vector<2x32xf32>
    %84 = arith.addf %83, %82 : vector<2x32xf32>
    %85 = arith.divf %83, %84 : vector<2x32xf32>
    %86 = vector.extract_strided_slice %69 {offsets = [0, 64], sizes = [2, 32], strides = [1, 1]} : vector<2x96xf32> to vector<2x32xf32>
    %87 = vector.extract_strided_slice %66 {offsets = [0, 64], sizes = [2, 32], strides = [1, 1]} : vector<2x96xf32> to vector<2x32xf32>
    %88 = vector.broadcast %4 : vector<1x32xf32> to vector<2x32xf32>
    %89 = arith.addf %87, %88 : vector<2x32xf32>
    %90 = arith.mulf %77, %89 : vector<2x32xf32>
    %91 = arith.addf %86, %90 : vector<2x32xf32>
    %92 = math.tanh %91 : vector<2x32xf32>
    %93 = arith.subf %65, %92 : vector<2x32xf32>
    %94 = arith.mulf %85, %93 : vector<2x32xf32>
    %95 = arith.addf %92, %94 : vector<2x32xf32>
    %c3_i32 = arith.constant 3 : i32
    %cst_21 = arith.constant dense<0.000000e+00> : vector<2x96xf32>
    %96 = tpu.matmul %95, %3, %cst_21 {dimension_numbers = #tpu.dot_dimension_numbers<[1], [0], [0], [1], [0, 0, 1, 1], [], []>} : vector<2x32xf32>, vector<32x96xf32>, vector<2x96xf32> -> vector<2x96xf32>
    %97 = arith.index_cast %c3_i32 : i32 to index
    %c0_22 = arith.constant 0 : index
    %c0_23 = arith.constant 0 : index
    %98 = vector.load %arg2[%97, %c0_22, %c0_23] : memref<8x2x96xf32, #tpu.memory_space<vmem>>, vector<1x2x96xf32>
    %99 = vector.shape_cast %98 : vector<1x2x96xf32> to vector<2x96xf32>
    %100 = vector.extract_strided_slice %99 {offsets = [0, 0], sizes = [2, 32], strides = [1, 1]} : vector<2x96xf32> to vector<2x32xf32>
    %101 = vector.extract_strided_slice %96 {offsets = [0, 0], sizes = [2, 32], strides = [1, 1]} : vector<2x96xf32> to vector<2x32xf32>
    %102 = arith.addf %100, %101 : vector<2x32xf32>
    %103 = arith.negf %102 : vector<2x32xf32>
    %104 = math.exp %103 : vector<2x32xf32>
    %cst_24 = arith.constant 1.000000e+00 : f32
    %105 = vector.broadcast %cst_24 : f32 to vector<2x32xf32>
    %106 = arith.addf %105, %104 : vector<2x32xf32>
    %107 = arith.divf %105, %106 : vector<2x32xf32>
    %108 = vector.extract_strided_slice %99 {offsets = [0, 32], sizes = [2, 32], strides = [1, 1]} : vector<2x96xf32> to vector<2x32xf32>
    %109 = vector.extract_strided_slice %96 {offsets = [0, 32], sizes = [2, 32], strides = [1, 1]} : vector<2x96xf32> to vector<2x32xf32>
    %110 = arith.addf %108, %109 : vector<2x32xf32>
    %111 = arith.negf %110 : vector<2x32xf32>
    %112 = math.exp %111 : vector<2x32xf32>
    %cst_25 = arith.constant 1.000000e+00 : f32
    %113 = vector.broadcast %cst_25 : f32 to vector<2x32xf32>
    %114 = arith.addf %113, %112 : vector<2x32xf32>
    %115 = arith.divf %113, %114 : vector<2x32xf32>
    %116 = vector.extract_strided_slice %99 {offsets = [0, 64], sizes = [2, 32], strides = [1, 1]} : vector<2x96xf32> to vector<2x32xf32>
    %117 = vector.extract_strided_slice %96 {offsets = [0, 64], sizes = [2, 32], strides = [1, 1]} : vector<2x96xf32> to vector<2x32xf32>
    %118 = vector.broadcast %4 : vector<1x32xf32> to vector<2x32xf32>
    %119 = arith.addf %117, %118 : vector<2x32xf32>
    %120 = arith.mulf %107, %119 : vector<2x32xf32>
    %121 = arith.addf %116, %120 : vector<2x32xf32>
    %122 = math.tanh %121 : vector<2x32xf32>
    %123 = arith.subf %95, %122 : vector<2x32xf32>
    %124 = arith.mulf %115, %123 : vector<2x32xf32>
    %125 = arith.addf %122, %124 : vector<2x32xf32>
    %c4_i32 = arith.constant 4 : i32
    %cst_26 = arith.constant dense<0.000000e+00> : vector<2x96xf32>
    %126 = tpu.matmul %125, %3, %cst_26 {dimension_numbers = #tpu.dot_dimension_numbers<[1], [0], [0], [1], [0, 0, 1, 1], [], []>} : vector<2x32xf32>, vector<32x96xf32>, vector<2x96xf32> -> vector<2x96xf32>
    %127 = arith.index_cast %c4_i32 : i32 to index
    %c0_27 = arith.constant 0 : index
    %c0_28 = arith.constant 0 : index
    %128 = vector.load %arg2[%127, %c0_27, %c0_28] : memref<8x2x96xf32, #tpu.memory_space<vmem>>, vector<1x2x96xf32>
    %129 = vector.shape_cast %128 : vector<1x2x96xf32> to vector<2x96xf32>
    %130 = vector.extract_strided_slice %129 {offsets = [0, 0], sizes = [2, 32], strides = [1, 1]} : vector<2x96xf32> to vector<2x32xf32>
    %131 = vector.extract_strided_slice %126 {offsets = [0, 0], sizes = [2, 32], strides = [1, 1]} : vector<2x96xf32> to vector<2x32xf32>
    %132 = arith.addf %130, %131 : vector<2x32xf32>
    %133 = arith.negf %132 : vector<2x32xf32>
    %134 = math.exp %133 : vector<2x32xf32>
    %cst_29 = arith.constant 1.000000e+00 : f32
    %135 = vector.broadcast %cst_29 : f32 to vector<2x32xf32>
    %136 = arith.addf %135, %134 : vector<2x32xf32>
    %137 = arith.divf %135, %136 : vector<2x32xf32>
    %138 = vector.extract_strided_slice %129 {offsets = [0, 32], sizes = [2, 32], strides = [1, 1]} : vector<2x96xf32> to vector<2x32xf32>
    %139 = vector.extract_strided_slice %126 {offsets = [0, 32], sizes = [2, 32], strides = [1, 1]} : vector<2x96xf32> to vector<2x32xf32>
    %140 = arith.addf %138, %139 : vector<2x32xf32>
    %141 = arith.negf %140 : vector<2x32xf32>
    %142 = math.exp %141 : vector<2x32xf32>
    %cst_30 = arith.constant 1.000000e+00 : f32
    %143 = vector.broadcast %cst_30 : f32 to vector<2x32xf32>
    %144 = arith.addf %143, %142 : vector<2x32xf32>
    %145 = arith.divf %143, %144 : vector<2x32xf32>
    %146 = vector.extract_strided_slice %129 {offsets = [0, 64], sizes = [2, 32], strides = [1, 1]} : vector<2x96xf32> to vector<2x32xf32>
    %147 = vector.extract_strided_slice %126 {offsets = [0, 64], sizes = [2, 32], strides = [1, 1]} : vector<2x96xf32> to vector<2x32xf32>
    %148 = vector.broadcast %4 : vector<1x32xf32> to vector<2x32xf32>
    %149 = arith.addf %147, %148 : vector<2x32xf32>
    %150 = arith.mulf %137, %149 : vector<2x32xf32>
    %151 = arith.addf %146, %150 : vector<2x32xf32>
    %152 = math.tanh %151 : vector<2x32xf32>
    %153 = arith.subf %125, %152 : vector<2x32xf32>
    %154 = arith.mulf %145, %153 : vector<2x32xf32>
    %155 = arith.addf %152, %154 : vector<2x32xf32>
    %c5_i32 = arith.constant 5 : i32
    %cst_31 = arith.constant dense<0.000000e+00> : vector<2x96xf32>
    %156 = tpu.matmul %155, %3, %cst_31 {dimension_numbers = #tpu.dot_dimension_numbers<[1], [0], [0], [1], [0, 0, 1, 1], [], []>} : vector<2x32xf32>, vector<32x96xf32>, vector<2x96xf32> -> vector<2x96xf32>
    %157 = arith.index_cast %c5_i32 : i32 to index
    %c0_32 = arith.constant 0 : index
    %c0_33 = arith.constant 0 : index
    %158 = vector.load %arg2[%157, %c0_32, %c0_33] : memref<8x2x96xf32, #tpu.memory_space<vmem>>, vector<1x2x96xf32>
    %159 = vector.shape_cast %158 : vector<1x2x96xf32> to vector<2x96xf32>
    %160 = vector.extract_strided_slice %159 {offsets = [0, 0], sizes = [2, 32], strides = [1, 1]} : vector<2x96xf32> to vector<2x32xf32>
    %161 = vector.extract_strided_slice %156 {offsets = [0, 0], sizes = [2, 32], strides = [1, 1]} : vector<2x96xf32> to vector<2x32xf32>
    %162 = arith.addf %160, %161 : vector<2x32xf32>
    %163 = arith.negf %162 : vector<2x32xf32>
    %164 = math.exp %163 : vector<2x32xf32>
    %cst_34 = arith.constant 1.000000e+00 : f32
    %165 = vector.broadcast %cst_34 : f32 to vector<2x32xf32>
    %166 = arith.addf %165, %164 : vector<2x32xf32>
    %167 = arith.divf %165, %166 : vector<2x32xf32>
    %168 = vector.extract_strided_slice %159 {offsets = [0, 32], sizes = [2, 32], strides = [1, 1]} : vector<2x96xf32> to vector<2x32xf32>
    %169 = vector.extract_strided_slice %156 {offsets = [0, 32], sizes = [2, 32], strides = [1, 1]} : vector<2x96xf32> to vector<2x32xf32>
    %170 = arith.addf %168, %169 : vector<2x32xf32>
    %171 = arith.negf %170 : vector<2x32xf32>
    %172 = math.exp %171 : vector<2x32xf32>
    %cst_35 = arith.constant 1.000000e+00 : f32
    %173 = vector.broadcast %cst_35 : f32 to vector<2x32xf32>
    %174 = arith.addf %173, %172 : vector<2x32xf32>
    %175 = arith.divf %173, %174 : vector<2x32xf32>
    %176 = vector.extract_strided_slice %159 {offsets = [0, 64], sizes = [2, 32], strides = [1, 1]} : vector<2x96xf32> to vector<2x32xf32>
    %177 = vector.extract_strided_slice %156 {offsets = [0, 64], sizes = [2, 32], strides = [1, 1]} : vector<2x96xf32> to vector<2x32xf32>
    %178 = vector.broadcast %4 : vector<1x32xf32> to vector<2x32xf32>
    %179 = arith.addf %177, %178 : vector<2x32xf32>
    %180 = arith.mulf %167, %179 : vector<2x32xf32>
    %181 = arith.addf %176, %180 : vector<2x32xf32>
    %182 = math.tanh %181 : vector<2x32xf32>
    %183 = arith.subf %155, %182 : vector<2x32xf32>
    %184 = arith.mulf %175, %183 : vector<2x32xf32>
    %185 = arith.addf %182, %184 : vector<2x32xf32>
    %c6_i32 = arith.constant 6 : i32
    %cst_36 = arith.constant dense<0.000000e+00> : vector<2x96xf32>
    %186 = tpu.matmul %185, %3, %cst_36 {dimension_numbers = #tpu.dot_dimension_numbers<[1], [0], [0], [1], [0, 0, 1, 1], [], []>} : vector<2x32xf32>, vector<32x96xf32>, vector<2x96xf32> -> vector<2x96xf32>
    %187 = arith.index_cast %c6_i32 : i32 to index
    %c0_37 = arith.constant 0 : index
    %c0_38 = arith.constant 0 : index
    %188 = vector.load %arg2[%187, %c0_37, %c0_38] : memref<8x2x96xf32, #tpu.memory_space<vmem>>, vector<1x2x96xf32>
    %189 = vector.shape_cast %188 : vector<1x2x96xf32> to vector<2x96xf32>
    %190 = vector.extract_strided_slice %189 {offsets = [0, 0], sizes = [2, 32], strides = [1, 1]} : vector<2x96xf32> to vector<2x32xf32>
    %191 = vector.extract_strided_slice %186 {offsets = [0, 0], sizes = [2, 32], strides = [1, 1]} : vector<2x96xf32> to vector<2x32xf32>
    %192 = arith.addf %190, %191 : vector<2x32xf32>
    %193 = arith.negf %192 : vector<2x32xf32>
    %194 = math.exp %193 : vector<2x32xf32>
    %cst_39 = arith.constant 1.000000e+00 : f32
    %195 = vector.broadcast %cst_39 : f32 to vector<2x32xf32>
    %196 = arith.addf %195, %194 : vector<2x32xf32>
    %197 = arith.divf %195, %196 : vector<2x32xf32>
    %198 = vector.extract_strided_slice %189 {offsets = [0, 32], sizes = [2, 32], strides = [1, 1]} : vector<2x96xf32> to vector<2x32xf32>
    %199 = vector.extract_strided_slice %186 {offsets = [0, 32], sizes = [2, 32], strides = [1, 1]} : vector<2x96xf32> to vector<2x32xf32>
    %200 = arith.addf %198, %199 : vector<2x32xf32>
    %201 = arith.negf %200 : vector<2x32xf32>
    %202 = math.exp %201 : vector<2x32xf32>
    %cst_40 = arith.constant 1.000000e+00 : f32
    %203 = vector.broadcast %cst_40 : f32 to vector<2x32xf32>
    %204 = arith.addf %203, %202 : vector<2x32xf32>
    %205 = arith.divf %203, %204 : vector<2x32xf32>
    %206 = vector.extract_strided_slice %189 {offsets = [0, 64], sizes = [2, 32], strides = [1, 1]} : vector<2x96xf32> to vector<2x32xf32>
    %207 = vector.extract_strided_slice %186 {offsets = [0, 64], sizes = [2, 32], strides = [1, 1]} : vector<2x96xf32> to vector<2x32xf32>
    %208 = vector.broadcast %4 : vector<1x32xf32> to vector<2x32xf32>
    %209 = arith.addf %207, %208 : vector<2x32xf32>
    %210 = arith.mulf %197, %209 : vector<2x32xf32>
    %211 = arith.addf %206, %210 : vector<2x32xf32>
    %212 = math.tanh %211 : vector<2x32xf32>
    %213 = arith.subf %185, %212 : vector<2x32xf32>
    %214 = arith.mulf %205, %213 : vector<2x32xf32>
    %215 = arith.addf %212, %214 : vector<2x32xf32>
    %c7_i32 = arith.constant 7 : i32
    %cst_41 = arith.constant dense<0.000000e+00> : vector<2x96xf32>
    %216 = tpu.matmul %215, %3, %cst_41 {dimension_numbers = #tpu.dot_dimension_numbers<[1], [0], [0], [1], [0, 0, 1, 1], [], []>} : vector<2x32xf32>, vector<32x96xf32>, vector<2x96xf32> -> vector<2x96xf32>
    %217 = arith.index_cast %c7_i32 : i32 to index
    %c0_42 = arith.constant 0 : index
    %c0_43 = arith.constant 0 : index
    %218 = vector.load %arg2[%217, %c0_42, %c0_43] : memref<8x2x96xf32, #tpu.memory_space<vmem>>, vector<1x2x96xf32>
    %219 = vector.shape_cast %218 : vector<1x2x96xf32> to vector<2x96xf32>
    %220 = vector.extract_strided_slice %219 {offsets = [0, 0], sizes = [2, 32], strides = [1, 1]} : vector<2x96xf32> to vector<2x32xf32>
    %221 = vector.extract_strided_slice %216 {offsets = [0, 0], sizes = [2, 32], strides = [1, 1]} : vector<2x96xf32> to vector<2x32xf32>
    %222 = arith.addf %220, %221 : vector<2x32xf32>
    %223 = arith.negf %222 : vector<2x32xf32>
    %224 = math.exp %223 : vector<2x32xf32>
    %cst_44 = arith.constant 1.000000e+00 : f32
    %225 = vector.broadcast %cst_44 : f32 to vector<2x32xf32>
    %226 = arith.addf %225, %224 : vector<2x32xf32>
    %227 = arith.divf %225, %226 : vector<2x32xf32>
    %228 = vector.extract_strided_slice %219 {offsets = [0, 32], sizes = [2, 32], strides = [1, 1]} : vector<2x96xf32> to vector<2x32xf32>
    %229 = vector.extract_strided_slice %216 {offsets = [0, 32], sizes = [2, 32], strides = [1, 1]} : vector<2x96xf32> to vector<2x32xf32>
    %230 = arith.addf %228, %229 : vector<2x32xf32>
    %231 = arith.negf %230 : vector<2x32xf32>
    %232 = math.exp %231 : vector<2x32xf32>
    %cst_45 = arith.constant 1.000000e+00 : f32
    %233 = vector.broadcast %cst_45 : f32 to vector<2x32xf32>
    %234 = arith.addf %233, %232 : vector<2x32xf32>
    %235 = arith.divf %233, %234 : vector<2x32xf32>
    %236 = vector.extract_strided_slice %219 {offsets = [0, 64], sizes = [2, 32], strides = [1, 1]} : vector<2x96xf32> to vector<2x32xf32>
    %237 = vector.extract_strided_slice %216 {offsets = [0, 64], sizes = [2, 32], strides = [1, 1]} : vector<2x96xf32> to vector<2x32xf32>
    %238 = vector.broadcast %4 : vector<1x32xf32> to vector<2x32xf32>
    %239 = arith.addf %237, %238 : vector<2x32xf32>
    %240 = arith.mulf %227, %239 : vector<2x32xf32>
    %241 = arith.addf %236, %240 : vector<2x32xf32>
    %242 = math.tanh %241 : vector<2x32xf32>
    %243 = arith.subf %215, %242 : vector<2x32xf32>
    %244 = arith.mulf %235, %243 : vector<2x32xf32>
    %245 = arith.addf %242, %244 : vector<2x32xf32>
    %c8_i32 = arith.constant 8 : i32
    %c0_46 = arith.constant 0 : index
    %c0_47 = arith.constant 0 : index
    %246 = vector.load %arg8[%c0_46, %c0_47] : memref<2x32xf32, #tpu.memory_space<vmem>>, vector<2x32xf32>
    tpu.vector_store %arg8[%c0_46, %c0_47], %245 {strides = array<i32>} : memref<2x32xf32, #tpu.memory_space<vmem>>, vector<2x32xf32>,
    %c0_i32_48 = arith.constant 0 : i32
    %247 = arith.cmpi eq, %arg1, %c0_i32_48 : i32
    %248 = arith.extui %247 : i1 to i32
    %c0_i32_49 = arith.constant 0 : i32
    %249 = arith.cmpi ne, %248, %c0_i32_49 : i32
    scf.if %249 {
      %c0_50 = arith.constant 0 : index
      %c0_51 = arith.constant 0 : index
      %250 = vector.load %arg5[%c0_50, %c0_51] : memref<32x8xf32, #tpu.memory_space<vmem>>, vector<32x8xf32>
      %cst_52 = arith.constant dense<0.000000e+00> : vector<2x8xf32>
      %251 = tpu.matmul %245, %250, %cst_52 {dimension_numbers = #tpu.dot_dimension_numbers<[1], [0], [0], [1], [0, 0, 1, 1], [], []>} : vector<2x32xf32>, vector<32x8xf32>, vector<2x8xf32> -> vector<2x8xf32>
      %c0_53 = arith.constant 0 : index
      %c0_54 = arith.constant 0 : index
      %252 = vector.load %arg6[%c0_53, %c0_54] : memref<1x8xf32, #tpu.memory_space<vmem>>, vector<1x8xf32>
      %253 = vector.broadcast %252 : vector<1x8xf32> to vector<2x8xf32>
      %254 = arith.addf %251, %253 : vector<2x8xf32>
      %c0_55 = arith.constant 0 : index
      %c0_56 = arith.constant 0 : index
      %255 = vector.load %arg7[%c0_55, %c0_56] : memref<2x8xf32, #tpu.memory_space<vmem>>, vector<2x8xf32>
      tpu.vector_store %arg7[%c0_55, %c0_56], %254 {strides = array<i32>} : memref<2x8xf32, #tpu.memory_space<vmem>>, vector<2x8xf32>,
    } else {
    }
    return
  }
  func.func @transform_0(%arg0: i32, %arg1: i32) -> (i32, i32, i32) {
    %c0_i32 = arith.constant 0 : i32
    %c0_i32_0 = arith.constant 0 : i32
    return %arg1, %arg0, %c0_i32 : i32, i32, i32
  }
  func.func @transform_1(%arg0: i32, %arg1: i32) -> (i32, i32) {
    %c0_i32 = arith.constant 0 : i32
    %c0_i32_0 = arith.constant 0 : i32
    %c0_i32_1 = arith.constant 0 : i32
    return %c0_i32, %c0_i32_0 : i32, i32
  }
  func.func @transform_2(%arg0: i32, %arg1: i32) -> (i32, i32) {
    %c0_i32 = arith.constant 0 : i32
    %c0_i32_0 = arith.constant 0 : i32
    %c0_i32_1 = arith.constant 0 : i32
    return %c0_i32, %c0_i32_0 : i32, i32
  }
  func.func @transform_3(%arg0: i32, %arg1: i32) -> (i32, i32) {
    %c0_i32 = arith.constant 0 : i32
    %c0_i32_0 = arith.constant 0 : i32
    %c0_i32_1 = arith.constant 0 : i32
    return %c0_i32, %c0_i32_0 : i32, i32
  }
  func.func @transform_4(%arg0: i32, %arg1: i32) -> (i32, i32) {
    %c0_i32 = arith.constant 0 : i32
    %c0_i32_0 = arith.constant 0 : i32
    %c0_i32_1 = arith.constant 0 : i32
    return %c0_i32, %c0_i32_0 : i32, i32
  }
  func.func @transform_5(%arg0: i32, %arg1: i32) -> (i32, i32) {
    %c0_i32 = arith.constant 0 : i32
    %c0_i32_0 = arith.constant 0 : i32
    return %arg0, %c0_i32 : i32, i32
  }
}

</mosaic_0001>

<llo_original>
// kernel: temporal_encoder_forward.4
$region0: #{temporal_encoder_forward.4}
  #allocation0 [shape = 'u32[]', space=smem, size = 0x4, offset = 0x4, fixed_abs, tag = 'smem constant byte address 0x4 - core index']
  #allocation1 [shape = 'u32[72,128]{1,0:T(1,128)}', space=vmem, size = 0x9000, scoped, tag = 'internal scratch']
  %s0 = inlined_call_operand.vmem [shape: f32[16,16], index: 0, kind: input, shape index: {}]
  %s1 = inlined_call_operand.hbm [shape: f32[16,96], index: 1, kind: input, shape index: {}]
  %s2 = inlined_call_operand.vmem [shape: f32[1,96], index: 2, kind: input, shape index: {}]
  %s3 = inlined_call_operand.vmem [shape: f32[16,96], index: 3, kind: output, shape index: {}]
  %s4 = sld [smem:[#allocation0]]
  $region26: #{temporal_encoder_forward.4} parent=0
    _
  %s6 = ssub.s32 1, %s4
  %s7 = scalar_select 0, %s6, %s4
  $region1: #{temporal_encoder_forward.4} parent=0
    #allocation2 [shape = 'u8[8192]{0}', space=vmem, size = 0x2000, scoped, tag = 'input window, operand 1, single buffered']
    #allocation3 [shape = 's32[1]{0}', space=sflag, size = 0x4, scoped, tag = 'scoped memory for temporal_encoder_forward.4']
    %8 = vsyncpa [#allocation3], 0
    // Predicated region
    $region2: #{temporal_encoder_forward.4} parent=1 // pred_check
      _
    $region3: #{temporal_encoder_forward.4} parent=1 // pred_check_branch
      %10 = sbr.rel (0) target = $region5
    $region4: #{temporal_encoder_forward.4} parent=1 // pred_region
      _
    $region5: #{temporal_encoder_forward.4} parent=1 // pred_fallthru
      _
    // Predicated region
    $region6: #{temporal_encoder_forward.4} parent=1 // pred_check
      _
    $region7: #{temporal_encoder_forward.4} parent=1 // pred_check_branch
      %12 = sbr.rel (0) target = $region9
    $region8: #{temporal_encoder_forward.4} parent=1 // pred_region
      %14 = vsyncadd [#allocation3], 0
      %s15 = sshll.u32 %s1, 4
      %s16 = int_to_ptr.hbm [resolvable:$true] %s15
      %s17 = sshll.u32 [#allocation2], 4
      %s18 = int_to_ptr.vmem [resolvable:$true] %s17
      %23 = dma.hbm_to_vmem [thread:$0]  %s16, 256, %s18, [#allocation3], 128, 128, 8
    $region9: #{temporal_encoder_forward.4} parent=1 // pred_fallthru
      _
    // Predicated region
    $region10: #{temporal_encoder_forward.4} parent=1 // pred_check
      _
    $region11: #{temporal_encoder_forward.4} parent=1 // pred_check_branch
      %25 = sbr.rel (0) target = $region13
    $region12: #{temporal_encoder_forward.4} parent=1 // pred_region
      _
    $region13: #{temporal_encoder_forward.4} parent=1 // pred_fallthru
      _
    // Predicated region
    $region14: #{temporal_encoder_forward.4} parent=1 // pred_check
      _
    $region15: #{temporal_encoder_forward.4} parent=1 // pred_check_branch
      %27 = sbr.rel (0) target = $region17
    $region16: #{temporal_encoder_forward.4} parent=1 // pred_region
      %29 = dma.done [#allocation3], 256
    $region17: #{temporal_encoder_forward.4} parent=1 // pred_fallthru
      _
    %v30 = vld [vmem:[%s0] sm:$0xff]
    %v31 = vld [vmem:[%s0 + $0x8] sm:$0xff]
    %v32 = vld [vmem:[#allocation2] sm:$0xff]
    %v33 = vld [vmem:[#allocation2 + $0x8] sm:$0xff]
    %v34 = vld [vmem:[%s2] sm:$0x1]
    %v36 = vperm.slane %v34, 0
    %vm38 = vcmask 130048
    %v40 = vsel %vm38, %v30, 0
    %v43 = vsel %vm38, %v31, 0
    %45 = vmatpush.msra.mxu0 0.0
    %46 = vmatpush.msra.mxu0 0.0
    %47 = vmatpush.msra.mxu0 0.0
    %48 = vmatpush.msra.mxu0 0.0
    %49 = vmatpush.msra.mxu0 0.0
    %50 = vmatpush.msra.mxu0 0.0
    %51 = vmatpush.msra.mxu0 0.0
    %52 = vmatpush.msra.mxu0 0.0
    %53 = vmatpush.msra.mxu0 0.0
    %54 = vmatpush.msra.mxu0 0.0
    %55 = vmatpush.msra.mxu0 0.0
    %56 = vmatpush.msra.mxu0 0.0
    %57 = vmatpush.msra.mxu0 0.0
    %58 = vmatpush.msra.mxu0 0.0
    %59 = vmatpush.msra.mxu0 %v33
    %60 = vmatpush.msra.mxu0 %v32
    %61 = vmatmul.f32.gmra.mxu0 %v40
    %v62 = vpop.f32.mrf.mxu0
    %v63 = vadd.f32 %v36, %v62
    %64 = vmatmul.f32.gmra.mxu0 %v43
    %v65 = vpop.f32.mrf.mxu0
    %v66 = vadd.f32 %v36, %v65
    %67 = vdwg.mxu0
    %vm68 = vcmask 785408
    %69 = vst.msk [vmem:[%s3] sm:$0xff] %vm68, %v63
    %70 = vst.msk [vmem:[%s3 + $0x8] sm:$0xff] %vm68, %v66
    // Predicated region
    $region18: #{temporal_encoder_forward.4} parent=1 // pred_check
      _
    $region19: #{temporal_encoder_forward.4} parent=1 // pred_check_branch
      %72 = sbr.rel (0) target = $region21
    $region20: #{temporal_encoder_forward.4} parent=1 // pred_region
      _
    $region21: #{temporal_encoder_forward.4} parent=1 // pred_fallthru
      _
    // Predicated region
    $region22: #{temporal_encoder_forward.4} parent=1 // pred_check
      _
    $region23: #{temporal_encoder_forward.4} parent=1 // pred_check_branch
      %74 = sbr.rel (0) target = $region25
    $region24: #{temporal_encoder_forward.4} parent=1 // pred_region
      _
    $region25: #{temporal_encoder_forward.4} parent=1 // pred_fallthru
      _
    %75 = vsyncpa [#allocation3], 1

// kernel: temporal_encoder_forward.6
$region0: #{temporal_encoder_forward.6}
  #allocation0 [shape = 'u32[]', space=smem, size = 0x4, offset = 0x4, fixed_abs, tag = 'smem constant byte address 0x4 - core index']
  #allocation1 [shape = 'u32[72,128]{1,0:T(1,128)}', space=vmem, size = 0x9000, scoped, tag = 'internal scratch']
  %s0 = inlined_call_operand.vmem [shape: f32[16,32], index: 0, kind: input, shape index: {}]
  %s1 = inlined_call_operand.hbm [shape: f32[32,96], index: 1, kind: input, shape index: {}]
  %s2 = inlined_call_operand.vmem [shape: f32[1,96], index: 2, kind: input, shape index: {}]
  %s3 = inlined_call_operand.vmem [shape: f32[16,96], index: 3, kind: output, shape index: {}]
  %s4 = sld [smem:[#allocation0]]
  $region26: #{temporal_encoder_forward.6} parent=0
    _
  %s6 = ssub.s32 1, %s4
  %s7 = scalar_select 0, %s6, %s4
  $region1: #{temporal_encoder_forward.6} parent=0
    #allocation2 [shape = 'u8[16384]{0}', space=vmem, size = 0x4000, scoped, tag = 'input window, operand 1, single buffered']
    #allocation3 [shape = 's32[1]{0}', space=sflag, size = 0x4, scoped, tag = 'scoped memory for temporal_encoder_forward.6']
    %8 = vsyncpa [#allocation3], 0
    // Predicated region
    $region2: #{temporal_encoder_forward.6} parent=1 // pred_check
      _
    $region3: #{temporal_encoder_forward.6} parent=1 // pred_check_branch
      %10 = sbr.rel (0) target = $region5
    $region4: #{temporal_encoder_forward.6} parent=1 // pred_region
      _
    $region5: #{temporal_encoder_forward.6} parent=1 // pred_fallthru
      _
    // Predicated region
    $region6: #{temporal_encoder_forward.6} parent=1 // pred_check
      _
    $region7: #{temporal_encoder_forward.6} parent=1 // pred_check_branch
      %12 = sbr.rel (0) target = $region9
    $region8: #{temporal_encoder_forward.6} parent=1 // pred_region
      %14 = vsyncadd [#allocation3], 0
      %s15 = sshll.u32 %s1, 4
      %s16 = int_to_ptr.hbm [resolvable:$true] %s15
      %s17 = sshll.u32 [#allocation2], 4
      %s18 = int_to_ptr.vmem [resolvable:$true] %s17
      %23 = dma.hbm_to_vmem [thread:$0]  %s16, 512, %s18, [#allocation3], 128, 128, 8
    $region9: #{temporal_encoder_forward.6} parent=1 // pred_fallthru
      _
    // Predicated region
    $region10: #{temporal_encoder_forward.6} parent=1 // pred_check
      _
    $region11: #{temporal_encoder_forward.6} parent=1 // pred_check_branch
      %25 = sbr.rel (0) target = $region13
    $region12: #{temporal_encoder_forward.6} parent=1 // pred_region
      _
    $region13: #{temporal_encoder_forward.6} parent=1 // pred_fallthru
      _
    // Predicated region
    $region14: #{temporal_encoder_forward.6} parent=1 // pred_check
      _
    $region15: #{temporal_encoder_forward.6} parent=1 // pred_check_branch
      %27 = sbr.rel (0) target = $region17
    $region16: #{temporal_encoder_forward.6} parent=1 // pred_region
      %29 = dma.done [#allocation3], 512
    $region17: #{temporal_encoder_forward.6} parent=1 // pred_fallthru
      _
    %v30 = vld [vmem:[%s0] sm:$0xff]
    %v31 = vld [vmem:[%s0 + $0x8] sm:$0xff]
    %v32 = vld [vmem:[#allocation2] sm:$0xff]
    %v33 = vld [vmem:[#allocation2 + $0x8] sm:$0xff]
    %v34 = vld [vmem:[#allocation2 + $0x10] sm:$0xff]
    %v35 = vld [vmem:[#allocation2 + $0x18] sm:$0xff]
    %v36 = vld [vmem:[%s2] sm:$0x1]
    %v38 = vperm.slane %v36, 0
    %vm40 = vcmask 261120
    %v42 = vsel %vm40, %v30, 0
    %v45 = vsel %vm40, %v31, 0
    %47 = vmatpush.msra.mxu0 0.0
    %48 = vmatpush.msra.mxu0 0.0
    %49 = vmatpush.msra.mxu0 0.0
    %50 = vmatpush.msra.mxu0 0.0
    %51 = vmatpush.msra.mxu0 0.0
    %52 = vmatpush.msra.mxu0 0.0
    %53 = vmatpush.msra.mxu0 0.0
    %54 = vmatpush.msra.mxu0 0.0
    %55 = vmatpush.msra.mxu0 0.0
    %56 = vmatpush.msra.mxu0 0.0
    %57 = vmatpush.msra.mxu0 0.0
    %58 = vmatpush.msra.mxu0 0.0
    %59 = vmatpush.msra.mxu0 %v35
    %60 = vmatpush.msra.mxu0 %v34
    %61 = vmatpush.msra.mxu0 %v33
    %62 = vmatpush.msra.mxu0 %v32
    %63 = vmatmul.f32.gmra.mxu0 %v42
    %v64 = vpop.f32.mrf.mxu0
    %v65 = vadd.f32 %v38, %v64
    %66 = vmatmul.f32.gmra.mxu0 %v45
    %v67 = vpop.f32.mrf.mxu0
    %v68 = vadd.f32 %v38, %v67
    %69 = vdwg.mxu0
    %vm70 = vcmask 785408
    %71 = vst.msk [vmem:[%s3] sm:$0xff] %vm70, %v65
    %72 = vst.msk [vmem:[%s3 + $0x8] sm:$0xff] %vm70, %v68
    // Predicated region
    $region18: #{temporal_encoder_forward.6} parent=1 // pred_check
      _
    $region19: #{temporal_encoder_forward.6} parent=1 // pred_check_branch
      %74 = sbr.rel (0) target = $region21
    $region20: #{temporal_encoder_forward.6} parent=1 // pred_region
      _
    $region21: #{temporal_encoder_forward.6} parent=1 // pred_fallthru
      _
    // Predicated region
    $region22: #{temporal_encoder_forward.6} parent=1 // pred_check
      _
    $region23: #{temporal_encoder_forward.6} parent=1 // pred_check_branch
      %76 = sbr.rel (0) target = $region25
    $region24: #{temporal_encoder_forward.6} parent=1 // pred_region
      _
    $region25: #{temporal_encoder_forward.6} parent=1 // pred_fallthru
      _
    %77 = vsyncpa [#allocation3], 1

// kernel: temporal_encoder_forward.5
$region0: #{temporal_encoder_forward.5}
  #allocation0 [shape = 'u32[]', space=smem, size = 0x4, offset = 0x4, fixed_abs, tag = 'smem constant byte address 0x4 - core index']
  #allocation1 [shape = 'u32[72,128]{1,0:T(1,128)}', space=vmem, size = 0x9000, scoped, tag = 'internal scratch']
  #allocation2 [shape = 'f32[2,32]{1,0:T(2,128)}', space=vmem, size = 0x400, scoped, tag = 'scratch operand']
  %s0 = inlined_call_operand.vmem [shape: f32[8,2,96], index: 0, kind: input, shape index: {}]
  %s1 = inlined_call_operand.vmem [shape: f32[32,96], index: 1, kind: input, shape index: {}]
  %s2 = inlined_call_operand.vmem [shape: f32[1,32], index: 2, kind: input, shape index: {}]
  %s3 = inlined_call_operand.vmem [shape: f32[8,2,32], index: 3, kind: output, shape index: {}]
  %s4 = sld [smem:[#allocation0]]
  $region26: #{temporal_encoder_forward.5} parent=0
    _
  %s6 = ssub.s32 1, %s4
  %s7 = scalar_select 0, %s6, %s4
  // Predicated region
  $region2: #{temporal_encoder_forward.5} parent=0 // pred_check
    _
  $region3: #{temporal_encoder_forward.5} parent=0 // pred_check_branch
    %9 = sbr.rel (0) target = $region5
  $region4: #{temporal_encoder_forward.5} parent=0 // pred_region
    _
  $region5: #{temporal_encoder_forward.5} parent=0 // pred_fallthru
    _
  // Predicated region
  $region6: #{temporal_encoder_forward.5} parent=0 // pred_check
    _
  $region7: #{temporal_encoder_forward.5} parent=0 // pred_check_branch
    %11 = sbr.rel (0) target = $region9
  $region8: #{temporal_encoder_forward.5} parent=0 // pred_region
    _
  $region9: #{temporal_encoder_forward.5} parent=0 // pred_fallthru
    _
  // Predicated region
  $region10: #{temporal_encoder_forward.5} parent=0 // pred_check
    _
  $region11: #{temporal_encoder_forward.5} parent=0 // pred_check_branch
    %13 = sbr.rel (0) target = $region13
  $region12: #{temporal_encoder_forward.5} parent=0 // pred_region
    _
  $region13: #{temporal_encoder_forward.5} parent=0 // pred_fallthru
    _
  %p14 = scmp.eq.s32.totalorder 0, 0
  // Predicated region
  $region14: #{temporal_encoder_forward.5} parent=0 // pred_check
    %p15 = pneg %p14
  $region15: #{temporal_encoder_forward.5} parent=0 // pred_check_branch
    %17 = sbr.rel (%p15) target = $region17
  $region16: #{temporal_encoder_forward.5} parent=0 // pred_region
    %vm18 = vcmask 254976
    %19 = vst.msk [vmem:[#allocation2] sm:$0x3] %vm18, 0.0
  $region17: #{temporal_encoder_forward.5} parent=0 // pred_fallthru
    _
  %v20 = vld [vmem:[%s1] sm:$0xff]
  %v21 = vld [vmem:[%s1 + $0x8] sm:$0xff]
  %v22 = vld [vmem:[%s1 + $0x10] sm:$0xff]
  %v23 = vld [vmem:[%s1 + $0x18] sm:$0xff]
  %v24 = vld [vmem:[%s2] sm:$0x1]
  %v25 = vld [vmem:[#allocation2] sm:$0x3]
  %vm26 = vcmask 261120
  %v28 = vsel %vm26, %v25, 0
  %30 = vmatpush.msra.mxu0 0.0
  %31 = vmatpush.msra.mxu0 0.0
  %32 = vmatpush.msra.mxu0 0.0
  %33 = vmatpush.msra.mxu0 0.0
  %34 = vmatpush.msra.mxu0 0.0
  %35 = vmatpush.msra.mxu0 0.0
  %36 = vmatpush.msra.mxu0 0.0
  %37 = vmatpush.msra.mxu0 0.0
  %38 = vmatpush.msra.mxu0 0.0
  %39 = vmatpush.msra.mxu0 0.0
  %40 = vmatpush.msra.mxu0 0.0
  %41 = vmatpush.msra.mxu0 0.0
  %42 = vmatpush.msra.mxu0 %v23
  %43 = vmatpush.msra.mxu0 %v22
  %44 = vmatpush.msra.mxu0 %v21
  %45 = vmatpush.msra.mxu0 %v20
  %46 = vmatmul.f32.gmra.mxu0 %v28
  %v47 = vpop.f32.mrf.mxu0
  %v48 = vadd.f32 0.0, %v47
  %49 = vdwg.mxu0
  %v50 = vld [vmem:[%s0] sm:$0x3]
  %v51 = vadd.f32 %v50, %v48
  %v52 = vxor.u32 %v51, 2147483648
  %v53 = vmul.f32 %v52, 1.442695
  %v54 = vpow.pop %v53
  %v55 = vadd.f32 %v54, 1.0
  %v56 = vrcp.pop %v55
  %v57 = vmul.f32 %v55, %v56
  %v58 = vsub.f32 1.0, %v57
  %v59 = vmul.f32 %v56, %v58
  %v60 = vadd.f32 %v56, %v59
  %vm61 = vweird.f32 %v55
  %vm62 = vweird.f32 %v56
  %vm63 = vmor %vm61, %vm62
  %v64 = vsel %vm63, %v56, %v60
  %v65 = vand.u32 2147483647, %v55
  %vm66 = vcmp.eq.f32.partialorder %v65, 8.507059e+37
  %v67 = vand.u32 %v55, 2147483648
  %v68 = vor.u32 1.1754944e-38, %v67
  %v69 = vsel %vm66, %v68, %v64
  %v70 = vmul.f32 1.0, %v69
  %v72 = vperm.slane %v24, 0
  %73 = vrot.lane.b32.xlu0 %v72, 64
  %v74 = vpop.permute.xlu0 %73
  %v76 = vadd.f32 %v48, %v74
  %78 = vrot.lane.b32.xlu0 %v76, 64
  %v79 = vpop.permute.xlu0 %78
  %v81 = vmul.f32 %v70, %v79
  %83 = vrot.lane.b32.xlu0 %v81, 64
  %v84 = vpop.permute.xlu0 %83
  %v86 = vadd.f32 %v50, %v84
  %v87 = vtanh.pop %v86
  %89 = vrot.lane.b32.xlu0 %v87, 64
  %v90 = vpop.permute.xlu0 %89
  %v92 = vsub.f32 %v25, %v90
  %94 = vrot.lane.b32.xlu0 %v92, 32
  %v95 = vpop.permute.xlu0 %94
  %v97 = vmul.f32 %v70, %v95
  %99 = vrot.lane.b32.xlu0 %v97, 32
  %v100 = vpop.permute.xlu0 %99
  %v102 = vadd.f32 %v87, %v100
  %104 = vrot.lane.b32.xlu0 %v102, 64
  %v105 = vpop.permute.xlu0 %104
  %vm107 = vcmask 254976
  %108 = vst.msk [vmem:[%s3] sm:$0x3] %vm107, %v105
  %v109 = vsel %vm26, %v105, 0
  %111 = vmatpush.msra.mxu0 0.0
  %112 = vmatpush.msra.mxu0 0.0
  %113 = vmatpush.msra.mxu0 0.0
  %114 = vmatpush.msra.mxu0 0.0
  %115 = vmatpush.msra.mxu0 0.0
  %116 = vmatpush.msra.mxu0 0.0
  %117 = vmatpush.msra.mxu0 0.0
  %118 = vmatpush.msra.mxu0 0.0
  %119 = vmatpush.msra.mxu0 0.0
  %120 = vmatpush.msra.mxu0 0.0
  %121 = vmatpush.msra.mxu0 0.0
  %122 = vmatpush.msra.mxu0 0.0
  %123 = vmatpush.msra.mxu0 %v23
  %124 = vmatpush.msra.mxu0 %v22
  %125 = vmatpush.msra.mxu0 %v21
  %126 = vmatpush.msra.mxu0 %v20
  %127 = vmatmul.f32.gmra.mxu0 %v109
  %v128 = vpop.f32.mrf.mxu0
  %v129 = vadd.f32 0.0, %v128
  %130 = vdwg.mxu0
  %s131 = scalar_lea.vmem %s0, 2
  %v132 = vld [vmem:[%s131] sm:$0x3]
  %v133 = vadd.f32 %v132, %v129
  %v134 = vxor.u32 %v133, 2147483648
  %v135 = vmul.f32 %v134, 1.442695
  %v136 = vpow.pop %v135
  %v137 = vadd.f32 %v136, 1.0
  %v138 = vrcp.pop %v137
  %v139 = vmul.f32 %v137, %v138
  %v140 = vsub.f32 1.0, %v139
  %v141 = vmul.f32 %v138, %v140
  %v142 = vadd.f32 %v138, %v141
  %vm143 = vweird.f32 %v137
  %vm144 = vweird.f32 %v138
  %vm145 = vmor %vm143, %vm144
  %v146 = vsel %vm145, %v138, %v142
  %v147 = vand.u32 2147483647, %v137
  %vm148 = vcmp.eq.f32.partialorder %v147, 8.507059e+37
  %v149 = vand.u32 %v137, 2147483648
  %v150 = vor.u32 1.1754944e-38, %v149
  %v151 = vsel %vm148, %v150, %v146
  %v152 = vmul.f32 1.0, %v151
  %v153 = vadd.f32 %v129, %v74
  %155 = vrot.lane.b32.xlu0 %v153, 64
  %v156 = vpop.permute.xlu0 %155
  %v158 = vmul.f32 %v152, %v156
  %160 = vrot.lane.b32.xlu0 %v158, 64
  %v161 = vpop.permute.xlu0 %160
  %v163 = vadd.f32 %v132, %v161
  %v164 = vtanh.pop %v163
  %v165 = vsub.f32 %v102, %v164
  %167 = vrot.lane.b32.xlu0 %v165, 96
  %v168 = vpop.permute.xlu0 %167
  %v170 = vmul.f32 %v152, %v168
  %172 = vrot.lane.b32.xlu0 %v170, 32
  %v173 = vpop.permute.xlu0 %172
  %v175 = vadd.f32 %v164, %v173
  %177 = vrot.lane.b32.xlu0 %v175, 64
  %v178 = vpop.permute.xlu0 %177
  %s180 = scalar_lea.vmem %s3, 2
  %181 = vst.msk [vmem:[%s180] sm:$0x3] %vm107, %v178
  %v182 = vsel %vm26, %v178, 0
  %184 = vmatpush.msra.mxu0 0.0
  %185 = vmatpush.msra.mxu0 0.0
  %186 = vmatpush.msra.mxu0 0.0
  %187 = vmatpush.msra.mxu0 0.0
  %188 = vmatpush.msra.mxu0 0.0
  %189 = vmatpush.msra.mxu0 0.0
  %190 = vmatpush.msra.mxu0 0.0
  %191 = vmatpush.msra.mxu0 0.0
  %192 = vmatpush.msra.mxu0 0.0
  %193 = vmatpush.msra.mxu0 0.0
  %194 = vmatpush.msra.mxu0 0.0
  %195 = vmatpush.msra.mxu0 0.0
  %196 = vmatpush.msra.mxu0 %v23
  %197 = vmatpush.msra.mxu0 %v22
  %198 = vmatpush.msra.mxu0 %v21
  %199 = vmatpush.msra.mxu0 %v20
  %200 = vmatmul.f32.gmra.mxu0 %v182
  %v201 = vpop.f32.mrf.mxu0
  %v202 = vadd.f32 0.0, %v201
  %203 = vdwg.mxu0
  %s204 = scalar_lea.vmem %s0, 4
  %v205 = vld [vmem:[%s204] sm:$0x3]
  %v206 = vadd.f32 %v205, %v202
  %v207 = vxor.u32 %v206, 2147483648
  %v208 = vmul.f32 %v207, 1.442695
  %v209 = vpow.pop %v208
  %v210 = vadd.f32 %v209, 1.0
  %v211 = vrcp.pop %v210
  %v212 = vmul.f32 %v210, %v211
  %v213 = vsub.f32 1.0, %v212
  %v214 = vmul.f32 %v211, %v213
  %v215 = vadd.f32 %v211, %v214
  %vm216 = vweird.f32 %v210
  %vm217 = vweird.f32 %v211
  %vm218 = vmor %vm216, %vm217
  %v219 = vsel %vm218, %v211, %v215
  %v220 = vand.u32 2147483647, %v210
  %vm221 = vcmp.eq.f32.partialorder %v220, 8.507059e+37
  %v222 = vand.u32 %v210, 2147483648
  %v223 = vor.u32 1.1754944e-38, %v222
  %v224 = vsel %vm221, %v223, %v219
  %v225 = vmul.f32 1.0, %v224
  %v226 = vadd.f32 %v202, %v74
  %228 = vrot.lane.b32.xlu0 %v226, 64
  %v229 = vpop.permute.xlu0 %228
  %v231 = vmul.f32 %v225, %v229
  %233 = vrot.lane.b32.xlu0 %v231, 64
  %v234 = vpop.permute.xlu0 %233
  %v236 = vadd.f32 %v205, %v234
  %v237 = vtanh.pop %v236
  %v238 = vsub.f32 %v175, %v237
  %240 = vrot.lane.b32.xlu0 %v238, 96
  %v241 = vpop.permute.xlu0 %240
  %v243 = vmul.f32 %v225, %v241
  %245 = vrot.lane.b32.xlu0 %v243, 32
  %v246 = vpop.permute.xlu0 %245
  %v248 = vadd.f32 %v237, %v246
  %250 = vrot.lane.b32.xlu0 %v248, 64
  %v251 = vpop.permute.xlu0 %250
  %s253 = scalar_lea.vmem %s3, 4
  %254 = vst.msk [vmem:[%s253] sm:$0x3] %vm107, %v251
  %v255 = vsel %vm26, %v251, 0
  %257 = vmatpush.msra.mxu0 0.0
  %258 = vmatpush.msra.mxu0 0.0
  %259 = vmatpush.msra.mxu0 0.0
  %260 = vmatpush.msra.mxu0 0.0
  %261 = vmatpush.msra.mxu0 0.0
  %262 = vmatpush.msra.mxu0 0.0
  %263 = vmatpush.msra.mxu0 0.0
  %264 = vmatpush.msra.mxu0 0.0
  %265 = vmatpush.msra.mxu0 0.0
  %266 = vmatpush.msra.mxu0 0.0
  %267 = vmatpush.msra.mxu0 0.0
  %268 = vmatpush.msra.mxu0 0.0
  %269 = vmatpush.msra.mxu0 %v23
  %270 = vmatpush.msra.mxu0 %v22
  %271 = vmatpush.msra.mxu0 %v21
  %272 = vmatpush.msra.mxu0 %v20
  %273 = vmatmul.f32.gmra.mxu0 %v255
  %v274 = vpop.f32.mrf.mxu0
  %v275 = vadd.f32 0.0, %v274
  %276 = vdwg.mxu0
  %s277 = scalar_lea.vmem %s0, 6
  %v278 = vld [vmem:[%s277] sm:$0x3]
  %v279 = vadd.f32 %v278, %v275
  %v280 = vxor.u32 %v279, 2147483648
  %v281 = vmul.f32 %v280, 1.442695
  %v282 = vpow.pop %v281
  %v283 = vadd.f32 %v282, 1.0
  %v284 = vrcp.pop %v283
  %v285 = vmul.f32 %v283, %v284
  %v286 = vsub.f32 1.0, %v285
  %v287 = vmul.f32 %v284, %v286
  %v288 = vadd.f32 %v284, %v287
  %vm289 = vweird.f32 %v283
  %vm290 = vweird.f32 %v284
  %vm291 = vmor %vm289, %vm290
  %v292 = vsel %vm291, %v284, %v288
  %v293 = vand.u32 2147483647, %v283
  %vm294 = vcmp.eq.f32.partialorder %v293, 8.507059e+37
  %v295 = vand.u32 %v283, 2147483648
  %v296 = vor.u32 1.1754944e-38, %v295
  %v297 = vsel %vm294, %v296, %v292
  %v298 = vmul.f32 1.0, %v297
  %v299 = vadd.f32 %v275, %v74
  %301 = vrot.lane.b32.xlu0 %v299, 64
  %v302 = vpop.permute.xlu0 %301
  %v304 = vmul.f32 %v298, %v302
  %306 = vrot.lane.b32.xlu0 %v304, 64
  %v307 = vpop.permute.xlu0 %306
  %v309 = vadd.f32 %v278, %v307
  %v310 = vtanh.pop %v309
  %v311 = vsub.f32 %v248, %v310
  %313 = vrot.lane.b32.xlu0 %v311, 96
  %v314 = vpop.permute.xlu0 %313
  %v316 = vmul.f32 %v298, %v314
  %318 = vrot.lane.b32.xlu0 %v316, 32
  %v319 = vpop.permute.xlu0 %318
  %v321 = vadd.f32 %v310, %v319
  %323 = vrot.lane.b32.xlu0 %v321, 64
  %v324 = vpop.permute.xlu0 %323
  %s326 = scalar_lea.vmem %s3, 6
  %327 = vst.msk [vmem:[%s326] sm:$0x3] %vm107, %v324
  %v328 = vsel %vm26, %v324, 0
  %330 = vmatpush.msra.mxu0 0.0
  %331 = vmatpush.msra.mxu0 0.0
  %332 = vmatpush.msra.mxu0 0.0
  %333 = vmatpush.msra.mxu0 0.0
  %334 = vmatpush.msra.mxu0 0.0
  %335 = vmatpush.msra.mxu0 0.0
  %336 = vmatpush.msra.mxu0 0.0
  %337 = vmatpush.msra.mxu0 0.0
  %338 = vmatpush.msra.mxu0 0.0
  %339 = vmatpush.msra.mxu0 0.0
  %340 = vmatpush.msra.mxu0 0.0
  %341 = vmatpush.msra.mxu0 0.0
  %342 = vmatpush.msra.mxu0 %v23
  %343 = vmatpush.msra.mxu0 %v22
  %344 = vmatpush.msra.mxu0 %v21
  %345 = vmatpush.msra.mxu0 %v20
  %346 = vmatmul.f32.gmra.mxu0 %v328
  %v347 = vpop.f32.mrf.mxu0
  %v348 = vadd.f32 0.0, %v347
  %349 = vdwg.mxu0
  %s350 = scalar_lea.vmem %s0, 8
  %v351 = vld [vmem:[%s350] sm:$0x3]
  %v352 = vadd.f32 %v351, %v348
  %v353 = vxor.u32 %v352, 2147483648
  %v354 = vmul.f32 %v353, 1.442695
  %v355 = vpow.pop %v354
  %v356 = vadd.f32 %v355, 1.0
  %v357 = vrcp.pop %v356
  %v358 = vmul.f32 %v356, %v357
  %v359 = vsub.f32 1.0, %v358
  %v360 = vmul.f32 %v357, %v359
  %v361 = vadd.f32 %v357, %v360
  %vm362 = vweird.f32 %v356
  %vm363 = vweird.f32 %v357
  %vm364 = vmor %vm362, %vm363
  %v365 = vsel %vm364, %v357, %v361
  %v366 = vand.u32 2147483647, %v356
  %vm367 = vcmp.eq.f32.partialorder %v366, 8.507059e+37
  %v368 = vand.u32 %v356, 2147483648
  %v369 = vor.u32 1.1754944e-38, %v368
  %v370 = vsel %vm367, %v369, %v365
  %v371 = vmul.f32 1.0, %v370
  %v372 = vadd.f32 %v348, %v74
  %374 = vrot.lane.b32.xlu0 %v372, 64
  %v375 = vpop.permute.xlu0 %374
  %v377 = vmul.f32 %v371, %v375
  %379 = vrot.lane.b32.xlu0 %v377, 64
  %v380 = vpop.permute.xlu0 %379
  %v382 = vadd.f32 %v351, %v380
  %v383 = vtanh.pop %v382
  %v384 = vsub.f32 %v321, %v383
  %386 = vrot.lane.b32.xlu0 %v384, 96
  %v387 = vpop.permute.xlu0 %386
  %v389 = vmul.f32 %v371, %v387
  %391 = vrot.lane.b32.xlu0 %v389, 32
  %v392 = vpop.permute.xlu0 %391
  %v394 = vadd.f32 %v383, %v392
  %396 = vrot.lane.b32.xlu0 %v394, 64
  %v397 = vpop.permute.xlu0 %396
  %s399 = scalar_lea.vmem %s3, 8
  %400 = vst.msk [vmem:[%s399] sm:$0x3] %vm107, %v397
  %v401 = vsel %vm26, %v397, 0
  %403 = vmatpush.msra.mxu0 0.0
  %404 = vmatpush.msra.mxu0 0.0
  %405 = vmatpush.msra.mxu0 0.0
  %406 = vmatpush.msra.mxu0 0.0
  %407 = vmatpush.msra.mxu0 0.0
  %408 = vmatpush.msra.mxu0 0.0
  %409 = vmatpush.msra.mxu0 0.0
  %410 = vmatpush.msra.mxu0 0.0
  %411 = vmatpush.msra.mxu0 0.0
  %412 = vmatpush.msra.mxu0 0.0
  %413 = vmatpush.msra.mxu0 0.0
  %414 = vmatpush.msra.mxu0 0.0
  %415 = vmatpush.msra.mxu0 %v23
  %416 = vmatpush.msra.mxu0 %v22
  %417 = vmatpush.msra.mxu0 %v21
  %418 = vmatpush.msra.mxu0 %v20
  %419 = vmatmul.f32.gmra.mxu0 %v401
  %v420 = vpop.f32.mrf.mxu0
  %v421 = vadd.f32 0.0, %v420
  %422 = vdwg.mxu0
  %s423 = scalar_lea.vmem %s0, 10
  %v424 = vld [vmem:[%s423] sm:$0x3]
  %v425 = vadd.f32 %v424, %v421
  %v426 = vxor.u32 %v425, 2147483648
  %v427 = vmul.f32 %v426, 1.442695
  %v428 = vpow.pop %v427
  %v429 = vadd.f32 %v428, 1.0
  %v430 = vrcp.pop %v429
  %v431 = vmul.f32 %v429, %v430
  %v432 = vsub.f32 1.0, %v431
  %v433 = vmul.f32 %v430, %v432
  %v434 = vadd.f32 %v430, %v433
  %vm435 = vweird.f32 %v429
  %vm436 = vweird.f32 %v430
  %vm437 = vmor %vm435, %vm436
  %v438 = vsel %vm437, %v430, %v434
  %v439 = vand.u32 2147483647, %v429
  %vm440 = vcmp.eq.f32.partialorder %v439, 8.507059e+37
  %v441 = vand.u32 %v429, 2147483648
  %v442 = vor.u32 1.1754944e-38, %v441
  %v443 = vsel %vm440, %v442, %v438
  %v444 = vmul.f32 1.0, %v443
  %v445 = vadd.f32 %v421, %v74
  %447 = vrot.lane.b32.xlu0 %v445, 64
  %v448 = vpop.permute.xlu0 %447
  %v450 = vmul.f32 %v444, %v448
  %452 = vrot.lane.b32.xlu0 %v450, 64
  %v453 = vpop.permute.xlu0 %452
  %v455 = vadd.f32 %v424, %v453
  %v456 = vtanh.pop %v455
  %v457 = vsub.f32 %v394, %v456
  %459 = vrot.lane.b32.xlu0 %v457, 96
  %v460 = vpop.permute.xlu0 %459
  %v462 = vmul.f32 %v444, %v460
  %464 = vrot.lane.b32.xlu0 %v462, 32
  %v465 = vpop.permute.xlu0 %464
  %v467 = vadd.f32 %v456, %v465
  %469 = vrot.lane.b32.xlu0 %v467, 64
  %v470 = vpop.permute.xlu0 %469
  %s472 = scalar_lea.vmem %s3, 10
  %473 = vst.msk [vmem:[%s472] sm:$0x3] %vm107, %v470
  %v474 = vsel %vm26, %v470, 0
  %476 = vmatpush.msra.mxu0 0.0
  %477 = vmatpush.msra.mxu0 0.0
  %478 = vmatpush.msra.mxu0 0.0
  %479 = vmatpush.msra.mxu0 0.0
  %480 = vmatpush.msra.mxu0 0.0
  %481 = vmatpush.msra.mxu0 0.0
  %482 = vmatpush.msra.mxu0 0.0
  %483 = vmatpush.msra.mxu0 0.0
  %484 = vmatpush.msra.mxu0 0.0
  %485 = vmatpush.msra.mxu0 0.0
  %486 = vmatpush.msra.mxu0 0.0
  %487 = vmatpush.msra.mxu0 0.0
  %488 = vmatpush.msra.mxu0 %v23
  %489 = vmatpush.msra.mxu0 %v22
  %490 = vmatpush.msra.mxu0 %v21
  %491 = vmatpush.msra.mxu0 %v20
  %492 = vmatmul.f32.gmra.mxu0 %v474
  %v493 = vpop.f32.mrf.mxu0
  %v494 = vadd.f32 0.0, %v493
  %495 = vdwg.mxu0
  %s496 = scalar_lea.vmem %s0, 12
  %v497 = vld [vmem:[%s496] sm:$0x3]
  %v498 = vadd.f32 %v497, %v494
  %v499 = vxor.u32 %v498, 2147483648
  %v500 = vmul.f32 %v499, 1.442695
  %v501 = vpow.pop %v500
  %v502 = vadd.f32 %v501, 1.0
  %v503 = vrcp.pop %v502
  %v504 = vmul.f32 %v502, %v503
  %v505 = vsub.f32 1.0, %v504
  %v506 = vmul.f32 %v503, %v505
  %v507 = vadd.f32 %v503, %v506
  %vm508 = vweird.f32 %v502
  %vm509 = vweird.f32 %v503
  %vm510 = vmor %vm508, %vm509
  %v511 = vsel %vm510, %v503, %v507
  %v512 = vand.u32 2147483647, %v502
  %vm513 = vcmp.eq.f32.partialorder %v512, 8.507059e+37
  %v514 = vand.u32 %v502, 2147483648
  %v515 = vor.u32 1.1754944e-38, %v514
  %v516 = vsel %vm513, %v515, %v511
  %v517 = vmul.f32 1.0, %v516
  %v518 = vadd.f32 %v494, %v74
  %520 = vrot.lane.b32.xlu0 %v518, 64
  %v521 = vpop.permute.xlu0 %520
  %v523 = vmul.f32 %v517, %v521
  %525 = vrot.lane.b32.xlu0 %v523, 64
  %v526 = vpop.permute.xlu0 %525
  %v528 = vadd.f32 %v497, %v526
  %v529 = vtanh.pop %v528
  %v530 = vsub.f32 %v467, %v529
  %532 = vrot.lane.b32.xlu0 %v530, 96
  %v533 = vpop.permute.xlu0 %532
  %v535 = vmul.f32 %v517, %v533
  %537 = vrot.lane.b32.xlu0 %v535, 32
  %v538 = vpop.permute.xlu0 %537
  %v540 = vadd.f32 %v529, %v538
  %542 = vrot.lane.b32.xlu0 %v540, 64
  %v543 = vpop.permute.xlu0 %542
  %s545 = scalar_lea.vmem %s3, 12
  %546 = vst.msk [vmem:[%s545] sm:$0x3] %vm107, %v543
  %v547 = vsel %vm26, %v543, 0
  %549 = vmatpush.msra.mxu0 0.0
  %550 = vmatpush.msra.mxu0 0.0
  %551 = vmatpush.msra.mxu0 0.0
  %552 = vmatpush.msra.mxu0 0.0
  %553 = vmatpush.msra.mxu0 0.0
  %554 = vmatpush.msra.mxu0 0.0
  %555 = vmatpush.msra.mxu0 0.0
  %556 = vmatpush.msra.mxu0 0.0
  %557 = vmatpush.msra.mxu0 0.0
  %558 = vmatpush.msra.mxu0 0.0
  %559 = vmatpush.msra.mxu0 0.0
  %560 = vmatpush.msra.mxu0 0.0
  %561 = vmatpush.msra.mxu0 %v23
  %562 = vmatpush.msra.mxu0 %v22
  %563 = vmatpush.msra.mxu0 %v21
  %564 = vmatpush.msra.mxu0 %v20
  %565 = vmatmul.f32.gmra.mxu0 %v547
  %v566 = vpop.f32.mrf.mxu0
  %v567 = vadd.f32 0.0, %v566
  %568 = vdwg.mxu0
  %s569 = scalar_lea.vmem %s0, 14
  %v570 = vld [vmem:[%s569] sm:$0x3]
  %v571 = vadd.f32 %v570, %v567
  %v572 = vxor.u32 %v571, 2147483648
  %v573 = vmul.f32 %v572, 1.442695
  %v574 = vpow.pop %v573
  %v575 = vadd.f32 %v574, 1.0
  %v576 = vrcp.pop %v575
  %v577 = vmul.f32 %v575, %v576
  %v578 = vsub.f32 1.0, %v577
  %v579 = vmul.f32 %v576, %v578
  %v580 = vadd.f32 %v576, %v579
  %vm581 = vweird.f32 %v575
  %vm582 = vweird.f32 %v576
  %vm583 = vmor %vm581, %vm582
  %v584 = vsel %vm583, %v576, %v580
  %v585 = vand.u32 2147483647, %v575
  %vm586 = vcmp.eq.f32.partialorder %v585, 8.507059e+37
  %v587 = vand.u32 %v575, 2147483648
  %v588 = vor.u32 1.1754944e-38, %v587
  %v589 = vsel %vm586, %v588, %v584
  %v590 = vmul.f32 1.0, %v589
  %v591 = vadd.f32 %v567, %v74
  %593 = vrot.lane.b32.xlu0 %v591, 64
  %v594 = vpop.permute.xlu0 %593
  %v596 = vmul.f32 %v590, %v594
  %598 = vrot.lane.b32.xlu0 %v596, 64
  %v599 = vpop.permute.xlu0 %598
  %v601 = vadd.f32 %v570, %v599
  %v602 = vtanh.pop %v601
  %v603 = vsub.f32 %v540, %v602
  %605 = vrot.lane.b32.xlu0 %v603, 96
  %v606 = vpop.permute.xlu0 %605
  %v608 = vmul.f32 %v590, %v606
  %610 = vrot.lane.b32.xlu0 %v608, 32
  %v611 = vpop.permute.xlu0 %610
  %v613 = vadd.f32 %v602, %v611
  %615 = vrot.lane.b32.xlu0 %v613, 64
  %v616 = vpop.permute.xlu0 %615
  %s618 = scalar_lea.vmem %s3, 14
  %619 = vst.msk [vmem:[%s618] sm:$0x3] %vm107, %v616
  %620 = vst.msk [vmem:[#allocation2] sm:$0x3] %vm107, %v616
  // Predicated region
  $region18: #{temporal_encoder_forward.5} parent=0 // pred_check
    _
  $region19: #{temporal_encoder_forward.5} parent=0 // pred_check_branch
    %622 = sbr.rel (0) target = $region21
  $region20: #{temporal_encoder_forward.5} parent=0 // pred_region
    _
  $region21: #{temporal_encoder_forward.5} parent=0 // pred_fallthru
    _
  // Predicated region
  $region22: #{temporal_encoder_forward.5} parent=0 // pred_check
    _
  $region23: #{temporal_encoder_forward.5} parent=0 // pred_check_branch
    %624 = sbr.rel (0) target = $region25
  $region24: #{temporal_encoder_forward.5} parent=0 // pred_region
    _
  $region25: #{temporal_encoder_forward.5} parent=0 // pred_fallthru
    _

// kernel: temporal_encoder_forward.7
$region0: #{temporal_encoder_forward.7}
  #allocation0 [shape = 'u32[]', space=smem, size = 0x4, offset = 0x4, fixed_abs, tag = 'smem constant byte address 0x4 - core index']
  #allocation1 [shape = 'u32[72,128]{1,0:T(1,128)}', space=vmem, size = 0x9000, scoped, tag = 'internal scratch']
  #allocation2 [shape = 'f32[2,32]{1,0:T(2,128)}', space=vmem, size = 0x400, scoped, tag = 'scratch operand']
  %s0 = inlined_call_operand.vmem [shape: f32[8,2,96], index: 0, kind: input, shape index: {}]
  %s1 = inlined_call_operand.vmem [shape: f32[32,96], index: 1, kind: input, shape index: {}]
  %s2 = inlined_call_operand.vmem [shape: f32[1,32], index: 2, kind: input, shape index: {}]
  %s3 = inlined_call_operand.vmem [shape: f32[32,8], index: 3, kind: input, shape index: {}]
  %s4 = inlined_call_operand.vmem [shape: f32[1,8], index: 4, kind: input, shape index: {}]
  %s5 = inlined_call_operand.hbm [shape: f32[2,8], index: 5, kind: output, shape index: {}]
  %s6 = sld [smem:[#allocation0]]
  $region38: #{temporal_encoder_forward.7} parent=0
    _
  %s8 = ssub.s32 1, %s6
  %s9 = scalar_select 0, %s8, %s6
  $region1: #{temporal_encoder_forward.7} parent=0
    #allocation3 [shape = 'u8[1024]{0}', space=vmem, size = 0x400, scoped, tag = 'output window, operand 0, single buffered']
    #allocation4 [shape = 's32[1]{0}', space=sflag, size = 0x4, scoped, tag = 'scoped memory for temporal_encoder_forward.7']
    %10 = vsyncpa [#allocation4], 0
    // Predicated region
    $region2: #{temporal_encoder_forward.7} parent=1 // pred_check
      _
    $region3: #{temporal_encoder_forward.7} parent=1 // pred_check_branch
      %12 = sbr.rel (0) target = $region5
    $region4: #{temporal_encoder_forward.7} parent=1 // pred_region
      _
    $region5: #{temporal_encoder_forward.7} parent=1 // pred_fallthru
      _
    // Predicated region
    $region6: #{temporal_encoder_forward.7} parent=1 // pred_check
      _
    $region7: #{temporal_encoder_forward.7} parent=1 // pred_check_branch
      %14 = sbr.rel (0) target = $region9
    $region8: #{temporal_encoder_forward.7} parent=1 // pred_region
      _
    $region9: #{temporal_encoder_forward.7} parent=1 // pred_fallthru
      _
    // Predicated region
    $region10: #{temporal_encoder_forward.7} parent=1 // pred_check
      _
    $region11: #{temporal_encoder_forward.7} parent=1 // pred_check_branch
      %16 = sbr.rel (0) target = $region13
    $region12: #{temporal_encoder_forward.7} parent=1 // pred_region
      _
    $region13: #{temporal_encoder_forward.7} parent=1 // pred_fallthru
      _
    // Predicated region
    $region14: #{temporal_encoder_forward.7} parent=1 // pred_check
      _
    $region15: #{temporal_encoder_forward.7} parent=1 // pred_check_branch
      %18 = sbr.rel (0) target = $region17
    $region16: #{temporal_encoder_forward.7} parent=1 // pred_region
      _
    $region17: #{temporal_encoder_forward.7} parent=1 // pred_fallthru
      _
    // Predicated region
    $region18: #{temporal_encoder_forward.7} parent=1 // pred_check
      _
    $region19: #{temporal_encoder_forward.7} parent=1 // pred_check_branch
      %20 = sbr.rel (0) target = $region21
    $region20: #{temporal_encoder_forward.7} parent=1 // pred_region
      _
    $region21: #{temporal_encoder_forward.7} parent=1 // pred_fallthru
      _
    %p21 = scmp.eq.s32.totalorder 0, 0
    // Predicated region
    $region22: #{temporal_encoder_forward.7} parent=1 // pred_check
      %p22 = pneg %p21
    $region23: #{temporal_encoder_forward.7} parent=1 // pred_check_branch
      %24 = sbr.rel (%p22) target = $region25
    $region24: #{temporal_encoder_forward.7} parent=1 // pred_region
      %vm25 = vcmask 254976
      %26 = vst.msk [vmem:[#allocation2] sm:$0x3] %vm25, 0.0
    $region25: #{temporal_encoder_forward.7} parent=1 // pred_fallthru
      _
    %v27 = vld [vmem:[%s1] sm:$0xff]
    %v28 = vld [vmem:[%s1 + $0x8] sm:$0xff]
    %v29 = vld [vmem:[%s1 + $0x10] sm:$0xff]
    %v30 = vld [vmem:[%s1 + $0x18] sm:$0xff]
    %v31 = vld [vmem:[%s2] sm:$0x1]
    %v32 = vld [vmem:[#allocation2] sm:$0x3]
    %vm33 = vcmask 261120
    %v35 = vsel %vm33, %v32, 0
    %37 = vmatpush.msra.mxu0 0.0
    %38 = vmatpush.msra.mxu0 0.0
    %39 = vmatpush.msra.mxu0 0.0
    %40 = vmatpush.msra.mxu0 0.0
    %41 = vmatpush.msra.mxu0 0.0
    %42 = vmatpush.msra.mxu0 0.0
    %43 = vmatpush.msra.mxu0 0.0
    %44 = vmatpush.msra.mxu0 0.0
    %45 = vmatpush.msra.mxu0 0.0
    %46 = vmatpush.msra.mxu0 0.0
    %47 = vmatpush.msra.mxu0 0.0
    %48 = vmatpush.msra.mxu0 0.0
    %49 = vmatpush.msra.mxu0 %v30
    %50 = vmatpush.msra.mxu0 %v29
    %51 = vmatpush.msra.mxu0 %v28
    %52 = vmatpush.msra.mxu0 %v27
    %53 = vmatmul.f32.gmra.mxu0 %v35
    %v54 = vpop.f32.mrf.mxu0
    %v55 = vadd.f32 0.0, %v54
    %56 = vdwg.mxu0
    %v57 = vld [vmem:[%s0] sm:$0x3]
    %v58 = vadd.f32 %v57, %v55
    %v59 = vxor.u32 %v58, 2147483648
    %v60 = vmul.f32 %v59, 1.442695
    %v61 = vpow.pop %v60
    %v62 = vadd.f32 %v61, 1.0
    %v63 = vrcp.pop %v62
    %v64 = vmul.f32 %v62, %v63
    %v65 = vsub.f32 1.0, %v64
    %v66 = vmul.f32 %v63, %v65
    %v67 = vadd.f32 %v63, %v66
    %vm68 = vweird.f32 %v62
    %vm69 = vweird.f32 %v63
    %vm70 = vmor %vm68, %vm69
    %v71 = vsel %vm70, %v63, %v67
    %v72 = vand.u32 2147483647, %v62
    %vm73 = vcmp.eq.f32.partialorder %v72, 8.507059e+37
    %v74 = vand.u32 %v62, 2147483648
    %v75 = vor.u32 1.1754944e-38, %v74
    %v76 = vsel %vm73, %v75, %v71
    %v77 = vmul.f32 1.0, %v76
    %v79 = vperm.slane %v31, 0
    %80 = vrot.lane.b32.xlu0 %v79, 64
    %v81 = vpop.permute.xlu0 %80
    %v83 = vadd.f32 %v55, %v81
    %85 = vrot.lane.b32.xlu0 %v83, 64
    %v86 = vpop.permute.xlu0 %85
    %v88 = vmul.f32 %v77, %v86
    %90 = vrot.lane.b32.xlu0 %v88, 64
    %v91 = vpop.permute.xlu0 %90
    %v93 = vadd.f32 %v57, %v91
    %v94 = vtanh.pop %v93
    %96 = vrot.lane.b32.xlu0 %v94, 64
    %v97 = vpop.permute.xlu0 %96
    %v99 = vsub.f32 %v32, %v97
    %101 = vrot.lane.b32.xlu0 %v99, 32
    %v102 = vpop.permute.xlu0 %101
    %v104 = vmul.f32 %v77, %v102
    %106 = vrot.lane.b32.xlu0 %v104, 32
    %v107 = vpop.permute.xlu0 %106
    %v109 = vadd.f32 %v94, %v107
    %111 = vrot.lane.b32.xlu0 %v109, 64
    %v112 = vpop.permute.xlu0 %111
    %v113 = vsel %vm33, %v112, 0
    %115 = vmatpush.msra.mxu0 0.0
    %116 = vmatpush.msra.mxu0 0.0
    %117 = vmatpush.msra.mxu0 0.0
    %118 = vmatpush.msra.mxu0 0.0
    %119 = vmatpush.msra.mxu0 0.0
    %120 = vmatpush.msra.mxu0 0.0
    %121 = vmatpush.msra.mxu0 0.0
    %122 = vmatpush.msra.mxu0 0.0
    %123 = vmatpush.msra.mxu0 0.0
    %124 = vmatpush.msra.mxu0 0.0
    %125 = vmatpush.msra.mxu0 0.0
    %126 = vmatpush.msra.mxu0 0.0
    %127 = vmatpush.msra.mxu0 %v30
    %128 = vmatpush.msra.mxu0 %v29
    %129 = vmatpush.msra.mxu0 %v28
    %130 = vmatpush.msra.mxu0 %v27
    %131 = vmatmul.f32.gmra.mxu0 %v113
    %v132 = vpop.f32.mrf.mxu0
    %v133 = vadd.f32 0.0, %v132
    %134 = vdwg.mxu0
    %s135 = scalar_lea.vmem %s0, 2
    %v136 = vld [vmem:[%s135] sm:$0x3]
    %v137 = vadd.f32 %v136, %v133
    %v138 = vxor.u32 %v137, 2147483648
    %v139 = vmul.f32 %v138, 1.442695
    %v140 = vpow.pop %v139
    %v141 = vadd.f32 %v140, 1.0
    %v142 = vrcp.pop %v141
    %v143 = vmul.f32 %v141, %v142
    %v144 = vsub.f32 1.0, %v143
    %v145 = vmul.f32 %v142, %v144
    %v146 = vadd.f32 %v142, %v145
    %vm147 = vweird.f32 %v141
    %vm148 = vweird.f32 %v142
    %vm149 = vmor %vm147, %vm148
    %v150 = vsel %vm149, %v142, %v146
    %v151 = vand.u32 2147483647, %v141
    %vm152 = vcmp.eq.f32.partialorder %v151, 8.507059e+37
    %v153 = vand.u32 %v141, 2147483648
    %v154 = vor.u32 1.1754944e-38, %v153
    %v155 = vsel %vm152, %v154, %v150
    %v156 = vmul.f32 1.0, %v155
    %v157 = vadd.f32 %v133, %v81
    %159 = vrot.lane.b32.xlu0 %v157, 64
    %v160 = vpop.permute.xlu0 %159
    %v162 = vmul.f32 %v156, %v160
    %164 = vrot.lane.b32.xlu0 %v162, 64
    %v165 = vpop.permute.xlu0 %164
    %v167 = vadd.f32 %v136, %v165
    %v168 = vtanh.pop %v167
    %v169 = vsub.f32 %v109, %v168
    %171 = vrot.lane.b32.xlu0 %v169, 96
    %v172 = vpop.permute.xlu0 %171
    %v174 = vmul.f32 %v156, %v172
    %176 = vrot.lane.b32.xlu0 %v174, 32
    %v177 = vpop.permute.xlu0 %176
    %v179 = vadd.f32 %v168, %v177
    %181 = vrot.lane.b32.xlu0 %v179, 64
    %v182 = vpop.permute.xlu0 %181
    %v183 = vsel %vm33, %v182, 0
    %185 = vmatpush.msra.mxu0 0.0
    %186 = vmatpush.msra.mxu0 0.0
    %187 = vmatpush.msra.mxu0 0.0
    %188 = vmatpush.msra.mxu0 0.0
    %189 = vmatpush.msra.mxu0 0.0
    %190 = vmatpush.msra.mxu0 0.0
    %191 = vmatpush.msra.mxu0 0.0
    %192 = vmatpush.msra.mxu0 0.0
    %193 = vmatpush.msra.mxu0 0.0
    %194 = vmatpush.msra.mxu0 0.0
    %195 = vmatpush.msra.mxu0 0.0
    %196 = vmatpush.msra.mxu0 0.0
    %197 = vmatpush.msra.mxu0 %v30
    %198 = vmatpush.msra.mxu0 %v29
    %199 = vmatpush.msra.mxu0 %v28
    %200 = vmatpush.msra.mxu0 %v27
    %201 = vmatmul.f32.gmra.mxu0 %v183
    %v202 = vpop.f32.mrf.mxu0
    %v203 = vadd.f32 0.0, %v202
    %204 = vdwg.mxu0
    %s205 = scalar_lea.vmem %s0, 4
    %v206 = vld [vmem:[%s205] sm:$0x3]
    %v207 = vadd.f32 %v206, %v203
    %v208 = vxor.u32 %v207, 2147483648
    %v209 = vmul.f32 %v208, 1.442695
    %v210 = vpow.pop %v209
    %v211 = vadd.f32 %v210, 1.0
    %v212 = vrcp.pop %v211
    %v213 = vmul.f32 %v211, %v212
    %v214 = vsub.f32 1.0, %v213
    %v215 = vmul.f32 %v212, %v214
    %v216 = vadd.f32 %v212, %v215
    %vm217 = vweird.f32 %v211
    %vm218 = vweird.f32 %v212
    %vm219 = vmor %vm217, %vm218
    %v220 = vsel %vm219, %v212, %v216
    %v221 = vand.u32 2147483647, %v211
    %vm222 = vcmp.eq.f32.partialorder %v221, 8.507059e+37
    %v223 = vand.u32 %v211, 2147483648
    %v224 = vor.u32 1.1754944e-38, %v223
    %v225 = vsel %vm222, %v224, %v220
    %v226 = vmul.f32 1.0, %v225
    %v227 = vadd.f32 %v203, %v81
    %229 = vrot.lane.b32.xlu0 %v227, 64
    %v230 = vpop.permute.xlu0 %229
    %v232 = vmul.f32 %v226, %v230
    %234 = vrot.lane.b32.xlu0 %v232, 64
    %v235 = vpop.permute.xlu0 %234
    %v237 = vadd.f32 %v206, %v235
    %v238 = vtanh.pop %v237
    %v239 = vsub.f32 %v179, %v238
    %241 = vrot.lane.b32.xlu0 %v239, 96
    %v242 = vpop.permute.xlu0 %241
    %v244 = vmul.f32 %v226, %v242
    %246 = vrot.lane.b32.xlu0 %v244, 32
    %v247 = vpop.permute.xlu0 %246
    %v249 = vadd.f32 %v238, %v247
    %251 = vrot.lane.b32.xlu0 %v249, 64
    %v252 = vpop.permute.xlu0 %251
    %v253 = vsel %vm33, %v252, 0
    %255 = vmatpush.msra.mxu0 0.0
    %256 = vmatpush.msra.mxu0 0.0
    %257 = vmatpush.msra.mxu0 0.0
    %258 = vmatpush.msra.mxu0 0.0
    %259 = vmatpush.msra.mxu0 0.0
    %260 = vmatpush.msra.mxu0 0.0
    %261 = vmatpush.msra.mxu0 0.0
    %262 = vmatpush.msra.mxu0 0.0
    %263 = vmatpush.msra.mxu0 0.0
    %264 = vmatpush.msra.mxu0 0.0
    %265 = vmatpush.msra.mxu0 0.0
    %266 = vmatpush.msra.mxu0 0.0
    %267 = vmatpush.msra.mxu0 %v30
    %268 = vmatpush.msra.mxu0 %v29
    %269 = vmatpush.msra.mxu0 %v28
    %270 = vmatpush.msra.mxu0 %v27
    %271 = vmatmul.f32.gmra.mxu0 %v253
    %v272 = vpop.f32.mrf.mxu0
    %v273 = vadd.f32 0.0, %v272
    %274 = vdwg.mxu0
    %s275 = scalar_lea.vmem %s0, 6
    %v276 = vld [vmem:[%s275] sm:$0x3]
    %v277 = vadd.f32 %v276, %v273
    %v278 = vxor.u32 %v277, 2147483648
    %v279 = vmul.f32 %v278, 1.442695
    %v280 = vpow.pop %v279
    %v281 = vadd.f32 %v280, 1.0
    %v282 = vrcp.pop %v281
    %v283 = vmul.f32 %v281, %v282
    %v284 = vsub.f32 1.0, %v283
    %v285 = vmul.f32 %v282, %v284
    %v286 = vadd.f32 %v282, %v285
    %vm287 = vweird.f32 %v281
    %vm288 = vweird.f32 %v282
    %vm289 = vmor %vm287, %vm288
    %v290 = vsel %vm289, %v282, %v286
    %v291 = vand.u32 2147483647, %v281
    %vm292 = vcmp.eq.f32.partialorder %v291, 8.507059e+37
    %v293 = vand.u32 %v281, 2147483648
    %v294 = vor.u32 1.1754944e-38, %v293
    %v295 = vsel %vm292, %v294, %v290
    %v296 = vmul.f32 1.0, %v295
    %v297 = vadd.f32 %v273, %v81
    %299 = vrot.lane.b32.xlu0 %v297, 64
    %v300 = vpop.permute.xlu0 %299
    %v302 = vmul.f32 %v296, %v300
    %304 = vrot.lane.b32.xlu0 %v302, 64
    %v305 = vpop.permute.xlu0 %304
    %v307 = vadd.f32 %v276, %v305
    %v308 = vtanh.pop %v307
    %v309 = vsub.f32 %v249, %v308
    %311 = vrot.lane.b32.xlu0 %v309, 96
    %v312 = vpop.permute.xlu0 %311
    %v314 = vmul.f32 %v296, %v312
    %316 = vrot.lane.b32.xlu0 %v314, 32
    %v317 = vpop.permute.xlu0 %316
    %v319 = vadd.f32 %v308, %v317
    %321 = vrot.lane.b32.xlu0 %v319, 64
    %v322 = vpop.permute.xlu0 %321
    %v323 = vsel %vm33, %v322, 0
    %325 = vmatpush.msra.mxu0 0.0
    %326 = vmatpush.msra.mxu0 0.0
    %327 = vmatpush.msra.mxu0 0.0
    %328 = vmatpush.msra.mxu0 0.0
    %329 = vmatpush.msra.mxu0 0.0
    %330 = vmatpush.msra.mxu0 0.0
    %331 = vmatpush.msra.mxu0 0.0
    %332 = vmatpush.msra.mxu0 0.0
    %333 = vmatpush.msra.mxu0 0.0
    %334 = vmatpush.msra.mxu0 0.0
    %335 = vmatpush.msra.mxu0 0.0
    %336 = vmatpush.msra.mxu0 0.0
    %337 = vmatpush.msra.mxu0 %v30
    %338 = vmatpush.msra.mxu0 %v29
    %339 = vmatpush.msra.mxu0 %v28
    %340 = vmatpush.msra.mxu0 %v27
    %341 = vmatmul.f32.gmra.mxu0 %v323
    %v342 = vpop.f32.mrf.mxu0
    %v343 = vadd.f32 0.0, %v342
    %344 = vdwg.mxu0
    %s345 = scalar_lea.vmem %s0, 8
    %v346 = vld [vmem:[%s345] sm:$0x3]
    %v347 = vadd.f32 %v346, %v343
    %v348 = vxor.u32 %v347, 2147483648
    %v349 = vmul.f32 %v348, 1.442695
    %v350 = vpow.pop %v349
    %v351 = vadd.f32 %v350, 1.0
    %v352 = vrcp.pop %v351
    %v353 = vmul.f32 %v351, %v352
    %v354 = vsub.f32 1.0, %v353
    %v355 = vmul.f32 %v352, %v354
    %v356 = vadd.f32 %v352, %v355
    %vm357 = vweird.f32 %v351
    %vm358 = vweird.f32 %v352
    %vm359 = vmor %vm357, %vm358
    %v360 = vsel %vm359, %v352, %v356
    %v361 = vand.u32 2147483647, %v351
    %vm362 = vcmp.eq.f32.partialorder %v361, 8.507059e+37
    %v363 = vand.u32 %v351, 2147483648
    %v364 = vor.u32 1.1754944e-38, %v363
    %v365 = vsel %vm362, %v364, %v360
    %v366 = vmul.f32 1.0, %v365
    %v367 = vadd.f32 %v343, %v81
    %369 = vrot.lane.b32.xlu0 %v367, 64
    %v370 = vpop.permute.xlu0 %369
    %v372 = vmul.f32 %v366, %v370
    %374 = vrot.lane.b32.xlu0 %v372, 64
    %v375 = vpop.permute.xlu0 %374
    %v377 = vadd.f32 %v346, %v375
    %v378 = vtanh.pop %v377
    %v379 = vsub.f32 %v319, %v378
    %381 = vrot.lane.b32.xlu0 %v379, 96
    %v382 = vpop.permute.xlu0 %381
    %v384 = vmul.f32 %v366, %v382
    %386 = vrot.lane.b32.xlu0 %v384, 32
    %v387 = vpop.permute.xlu0 %386
    %v389 = vadd.f32 %v378, %v387
    %391 = vrot.lane.b32.xlu0 %v389, 64
    %v392 = vpop.permute.xlu0 %391
    %v393 = vsel %vm33, %v392, 0
    %395 = vmatpush.msra.mxu0 0.0
    %396 = vmatpush.msra.mxu0 0.0
    %397 = vmatpush.msra.mxu0 0.0
    %398 = vmatpush.msra.mxu0 0.0
    %399 = vmatpush.msra.mxu0 0.0
    %400 = vmatpush.msra.mxu0 0.0
    %401 = vmatpush.msra.mxu0 0.0
    %402 = vmatpush.msra.mxu0 0.0
    %403 = vmatpush.msra.mxu0 0.0
    %404 = vmatpush.msra.mxu0 0.0
    %405 = vmatpush.msra.mxu0 0.0
    %406 = vmatpush.msra.mxu0 0.0
    %407 = vmatpush.msra.mxu0 %v30
    %408 = vmatpush.msra.mxu0 %v29
    %409 = vmatpush.msra.mxu0 %v28
    %410 = vmatpush.msra.mxu0 %v27
    %411 = vmatmul.f32.gmra.mxu0 %v393
    %v412 = vpop.f32.mrf.mxu0
    %v413 = vadd.f32 0.0, %v412
    %414 = vdwg.mxu0
    %s415 = scalar_lea.vmem %s0, 10
    %v416 = vld [vmem:[%s415] sm:$0x3]
    %v417 = vadd.f32 %v416, %v413
    %v418 = vxor.u32 %v417, 2147483648
    %v419 = vmul.f32 %v418, 1.442695
    %v420 = vpow.pop %v419
    %v421 = vadd.f32 %v420, 1.0
    %v422 = vrcp.pop %v421
    %v423 = vmul.f32 %v421, %v422
    %v424 = vsub.f32 1.0, %v423
    %v425 = vmul.f32 %v422, %v424
    %v426 = vadd.f32 %v422, %v425
    %vm427 = vweird.f32 %v421
    %vm428 = vweird.f32 %v422
    %vm429 = vmor %vm427, %vm428
    %v430 = vsel %vm429, %v422, %v426
    %v431 = vand.u32 2147483647, %v421
    %vm432 = vcmp.eq.f32.partialorder %v431, 8.507059e+37
    %v433 = vand.u32 %v421, 2147483648
    %v434 = vor.u32 1.1754944e-38, %v433
    %v435 = vsel %vm432, %v434, %v430
    %v436 = vmul.f32 1.0, %v435
    %v437 = vadd.f32 %v413, %v81
    %439 = vrot.lane.b32.xlu0 %v437, 64
    %v440 = vpop.permute.xlu0 %439
    %v442 = vmul.f32 %v436, %v440
    %444 = vrot.lane.b32.xlu0 %v442, 64
    %v445 = vpop.permute.xlu0 %444
    %v447 = vadd.f32 %v416, %v445
    %v448 = vtanh.pop %v447
    %v449 = vsub.f32 %v389, %v448
    %451 = vrot.lane.b32.xlu0 %v449, 96
    %v452 = vpop.permute.xlu0 %451
    %v454 = vmul.f32 %v436, %v452
    %456 = vrot.lane.b32.xlu0 %v454, 32
    %v457 = vpop.permute.xlu0 %456
    %v459 = vadd.f32 %v448, %v457
    %461 = vrot.lane.b32.xlu0 %v459, 64
    %v462 = vpop.permute.xlu0 %461
    %v463 = vsel %vm33, %v462, 0
    %465 = vmatpush.msra.mxu0 0.0
    %466 = vmatpush.msra.mxu0 0.0
    %467 = vmatpush.msra.mxu0 0.0
    %468 = vmatpush.msra.mxu0 0.0
    %469 = vmatpush.msra.mxu0 0.0
    %470 = vmatpush.msra.mxu0 0.0
    %471 = vmatpush.msra.mxu0 0.0
    %472 = vmatpush.msra.mxu0 0.0
    %473 = vmatpush.msra.mxu0 0.0
    %474 = vmatpush.msra.mxu0 0.0
    %475 = vmatpush.msra.mxu0 0.0
    %476 = vmatpush.msra.mxu0 0.0
    %477 = vmatpush.msra.mxu0 %v30
    %478 = vmatpush.msra.mxu0 %v29
    %479 = vmatpush.msra.mxu0 %v28
    %480 = vmatpush.msra.mxu0 %v27
    %481 = vmatmul.f32.gmra.mxu0 %v463
    %v482 = vpop.f32.mrf.mxu0
    %v483 = vadd.f32 0.0, %v482
    %484 = vdwg.mxu0
    %s485 = scalar_lea.vmem %s0, 12
    %v486 = vld [vmem:[%s485] sm:$0x3]
    %v487 = vadd.f32 %v486, %v483
    %v488 = vxor.u32 %v487, 2147483648
    %v489 = vmul.f32 %v488, 1.442695
    %v490 = vpow.pop %v489
    %v491 = vadd.f32 %v490, 1.0
    %v492 = vrcp.pop %v491
    %v493 = vmul.f32 %v491, %v492
    %v494 = vsub.f32 1.0, %v493
    %v495 = vmul.f32 %v492, %v494
    %v496 = vadd.f32 %v492, %v495
    %vm497 = vweird.f32 %v491
    %vm498 = vweird.f32 %v492
    %vm499 = vmor %vm497, %vm498
    %v500 = vsel %vm499, %v492, %v496
    %v501 = vand.u32 2147483647, %v491
    %vm502 = vcmp.eq.f32.partialorder %v501, 8.507059e+37
    %v503 = vand.u32 %v491, 2147483648
    %v504 = vor.u32 1.1754944e-38, %v503
    %v505 = vsel %vm502, %v504, %v500
    %v506 = vmul.f32 1.0, %v505
    %v507 = vadd.f32 %v483, %v81
    %509 = vrot.lane.b32.xlu0 %v507, 64
    %v510 = vpop.permute.xlu0 %509
    %v512 = vmul.f32 %v506, %v510
    %514 = vrot.lane.b32.xlu0 %v512, 64
    %v515 = vpop.permute.xlu0 %514
    %v517 = vadd.f32 %v486, %v515
    %v518 = vtanh.pop %v517
    %v519 = vsub.f32 %v459, %v518
    %521 = vrot.lane.b32.xlu0 %v519, 96
    %v522 = vpop.permute.xlu0 %521
    %v524 = vmul.f32 %v506, %v522
    %526 = vrot.lane.b32.xlu0 %v524, 32
    %v527 = vpop.permute.xlu0 %526
    %v529 = vadd.f32 %v518, %v527
    %531 = vrot.lane.b32.xlu0 %v529, 64
    %v532 = vpop.permute.xlu0 %531
    %v533 = vsel %vm33, %v532, 0
    %535 = vmatpush.msra.mxu0 0.0
    %536 = vmatpush.msra.mxu0 0.0
    %537 = vmatpush.msra.mxu0 0.0
    %538 = vmatpush.msra.mxu0 0.0
    %539 = vmatpush.msra.mxu0 0.0
    %540 = vmatpush.msra.mxu0 0.0
    %541 = vmatpush.msra.mxu0 0.0
    %542 = vmatpush.msra.mxu0 0.0
    %543 = vmatpush.msra.mxu0 0.0
    %544 = vmatpush.msra.mxu0 0.0
    %545 = vmatpush.msra.mxu0 0.0
    %546 = vmatpush.msra.mxu0 0.0
    %547 = vmatpush.msra.mxu0 %v30
    %548 = vmatpush.msra.mxu0 %v29
    %549 = vmatpush.msra.mxu0 %v28
    %550 = vmatpush.msra.mxu0 %v27
    %551 = vmatmul.f32.gmra.mxu0 %v533
    %v552 = vpop.f32.mrf.mxu0
    %v553 = vadd.f32 0.0, %v552
    %554 = vdwg.mxu0
    %s555 = scalar_lea.vmem %s0, 14
    %v556 = vld [vmem:[%s555] sm:$0x3]
    %v557 = vadd.f32 %v556, %v553
    %v558 = vxor.u32 %v557, 2147483648
    %v559 = vmul.f32 %v558, 1.442695
    %v560 = vpow.pop %v559
    %v561 = vadd.f32 %v560, 1.0
    %v562 = vrcp.pop %v561
    %v563 = vmul.f32 %v561, %v562
    %v564 = vsub.f32 1.0, %v563
    %v565 = vmul.f32 %v562, %v564
    %v566 = vadd.f32 %v562, %v565
    %vm567 = vweird.f32 %v561
    %vm568 = vweird.f32 %v562
    %vm569 = vmor %vm567, %vm568
    %v570 = vsel %vm569, %v562, %v566
    %v571 = vand.u32 2147483647, %v561
    %vm572 = vcmp.eq.f32.partialorder %v571, 8.507059e+37
    %v573 = vand.u32 %v561, 2147483648
    %v574 = vor.u32 1.1754944e-38, %v573
    %v575 = vsel %vm572, %v574, %v570
    %v576 = vmul.f32 1.0, %v575
    %v577 = vadd.f32 %v553, %v81
    %579 = vrot.lane.b32.xlu0 %v577, 64
    %v580 = vpop.permute.xlu0 %579
    %v582 = vmul.f32 %v576, %v580
    %584 = vrot.lane.b32.xlu0 %v582, 64
    %v585 = vpop.permute.xlu0 %584
    %v587 = vadd.f32 %v556, %v585
    %v588 = vtanh.pop %v587
    %v589 = vsub.f32 %v529, %v588
    %591 = vrot.lane.b32.xlu0 %v589, 96
    %v592 = vpop.permute.xlu0 %591
    %v594 = vmul.f32 %v576, %v592
    %596 = vrot.lane.b32.xlu0 %v594, 32
    %v597 = vpop.permute.xlu0 %596
    %v599 = vadd.f32 %v588, %v597
    %601 = vrot.lane.b32.xlu0 %v599, 64
    %v602 = vpop.permute.xlu0 %601
    %vm604 = vcmask 254976
    %605 = vst.msk [vmem:[#allocation2] sm:$0x3] %vm604, %v602
    // Predicated region
    $region26: #{temporal_encoder_forward.7} parent=1 // pred_check
      %p606 = pneg %p21
    $region27: #{temporal_encoder_forward.7} parent=1 // pred_check_branch
      %608 = sbr.rel (%p606) target = $region29
    $region28: #{temporal_encoder_forward.7} parent=1 // pred_region
      %v609 = vld [vmem:[%s3] sm:$0xff]
      %v610 = vld [vmem:[%s3 + $0x8] sm:$0xff]
      %v611 = vld [vmem:[%s3 + $0x10] sm:$0xff]
      %v612 = vld [vmem:[%s3 + $0x18] sm:$0xff]
      %v613 = vld [vmem:[%s4] sm:$0x1]
      %v615 = vperm.slane %v613, 0
      %v617 = vsel %vm33, %v602, 0
      %619 = vmatpush.msra.mxu0 0.0
      %620 = vmatpush.msra.mxu0 0.0
      %621 = vmatpush.msra.mxu0 0.0
      %622 = vmatpush.msra.mxu0 0.0
      %623 = vmatpush.msra.mxu0 0.0
      %624 = vmatpush.msra.mxu0 0.0
      %625 = vmatpush.msra.mxu0 0.0
      %626 = vmatpush.msra.mxu0 0.0
      %627 = vmatpush.msra.mxu0 0.0
      %628 = vmatpush.msra.mxu0 0.0
      %629 = vmatpush.msra.mxu0 0.0
      %630 = vmatpush.msra.mxu0 0.0
      %631 = vmatpush.msra.mxu0 %v612
      %632 = vmatpush.msra.mxu0 %v611
      %633 = vmatpush.msra.mxu0 %v610
      %634 = vmatpush.msra.mxu0 %v609
      %635 = vmatmul.f32.gmra.mxu0 %v617
      %v636 = vpop.f32.mrf.mxu0
      %v637 = vadd.f32 %v615, %v636
      %638 = vdwg.mxu0
      %vm639 = vcmask 58368
      %640 = vst.msk [vmem:[#allocation3] sm:$0x3] %vm639, %v637
    $region29: #{temporal_encoder_forward.7} parent=1 // pred_fallthru
      _
    // Predicated region
    $region30: #{temporal_encoder_forward.7} parent=1 // pred_check
      _
    $region31: #{temporal_encoder_forward.7} parent=1 // pred_check_branch
      %642 = sbr.rel (0) target = $region33
    $region32: #{temporal_encoder_forward.7} parent=1 // pred_region
      %644 = vsyncadd [#allocation4], 0
      %s646 = sshll.u32 [#allocation3], 4
      %s647 = int_to_ptr.vmem [resolvable:$true] %s646
      %s648 = sshll.u32 %s5, 4
      %s649 = int_to_ptr.hbm [resolvable:$true] %s648
      %651 = dma.vmem_to_hbm [thread:$0]  %s647, 32, %s649, [#allocation4]
    $region33: #{temporal_encoder_forward.7} parent=1 // pred_fallthru
      _
    // Predicated region
    $region34: #{temporal_encoder_forward.7} parent=1 // pred_check
      _
    $region35: #{temporal_encoder_forward.7} parent=1 // pred_check_branch
      %653 = sbr.rel (0) target = $region37
    $region36: #{temporal_encoder_forward.7} parent=1 // pred_region
      %655 = dma.done [#allocation4], 32
    $region37: #{temporal_encoder_forward.7} parent=1 // pred_fallthru
      _
    %656 = vsyncpa [#allocation4], 1

</llo_original>
